<compile_context>
chip_gen: v7x
topology: tpu7x:2x2x1
jax: 0.10.0
libtpu: 0.0.40
codegen_flags: <defaults>
</compile_context>

<pallas_src>
import jax
import jax.numpy as jnp
import numpy as np
from jax import lax
from jax.experimental import pallas as pl
from jax.experimental.pallas import tpu as pltpu

# ----------------------------- configuration --------------------------------
S = 8          # qlen = klen = rlen
B = 2          # batch size
N_HEAD = 2
D_HEAD = 16
D_MODEL = 32   # = N_HEAD * D_HEAD
D_INNER = 64
LN_EPS = 1e-5  # torch nn.LayerNorm default


# ------------------------------ helpers --------------------------------------
def _layernorm(x, g, b):
    mu = jnp.mean(x, axis=-1, keepdims=True)
    var = jnp.mean((x - mu) ** 2, axis=-1, keepdims=True)
    return (x - mu) * lax.rsqrt(var + LN_EPS) * g + b


def _rel_shift_2d(x):
    """Exact torch _rel_shift for one (qlen, rlen) slice with qlen == rlen.

    out[i, j] = x[i, R-1-i+j]   for j <= i
              = 0               for j == i+1
              = x[i+1, j-i-2]   for j >= i+2
    Built only from static lane/sublane slices + concats (no reshapes), so it
    lowers cleanly in Mosaic and operates on data already resident in VMEM.
    """
    q, r = x.shape
    assert q == r, "rel_shift implemented for qlen == rlen (mems=None path)"
    zero = jnp.zeros((1, 1), x.dtype)
    rows = []
    for i in range(q):
        left = x[i:i + 1, r - 1 - i:]            # (1, i+1)
        if i == q - 1:
            rows.append(left)                    # last row: full row of x
            continue
        pieces = [left, zero]                    # out[i, i+1] = 0
        rem = r - i - 2
        if rem > 0:
            pieces.append(x[i + 1:i + 2, :rem])  # spill-over from next query row
        rows.append(jnp.concatenate(pieces, axis=1))
    return jnp.concatenate(rows, axis=0)


# ------------------------------- kernel ---------------------------------------
def _decoder_layer_kernel(w_ref, r_ref, wqkv_ref, wr_ref, rwb_ref, rrb_ref,
                          wo_ref, ln1g_ref, ln1b_ref, wff1_ref, wff2_ref,
                          ln2g_ref, ln2b_ref,
                          out_ref, hid_ref, prob_ref):
    f32, bf16 = jnp.float32, jnp.bfloat16
    seq, _ = w_ref.shape                      # (qlen, d_model) for this batch element
    nh = prob_ref.shape[0]                    # n_head
    hdh = rwb_ref.shape[-1]                   # n_head * d_head (biases are flattened)
    dh = hdh // nh
    scale = 1.0 / (dh ** 0.5)

    w = w_ref[...]                            # (S, D) f32 (kept f32 for residual)

    # qkv_net and r_net projections: bf16 MXU operands, f32 accumulation.
    heads = jnp.dot(w.astype(bf16), wqkv_ref[...],
                    preferred_element_type=f32)              # (S, 3*H*Dh) f32
    rk = jnp.dot(r_ref[...], wr_ref[...],
                 preferred_element_type=f32)                 # (R, H*Dh) f32

    q_all = heads[:, :hdh]                                   # (S, H*Dh)
    k_all = heads[:, hdh:2 * hdh]
    v_all = heads[:, 2 * hdh:]

    # Bias add + 1/sqrt(d_head) scale hoisted out of the head loop (f32, one VPU
    # pass for all heads), then cast to bf16 for the MXU. Scaling the query is
    # algebraically identical to scaling (AC + BD) afterwards (rel_shift is a
    # permutation with zero fill).
    rwq = ((q_all + rwb_ref[...]) * scale).astype(bf16)      # rows for AC
    rrq = ((q_all + rrb_ref[...]) * scale).astype(bf16)      # rows for BD

    vecs = []
    for h in range(nh):
        sl = slice(h * dh, (h + 1) * dh)
        # Merge AC and BD into one MXU push:
        #   rows    = [(q + r_w_bias)*scale ; (q + r_r_bias)*scale]   (2S, Dh)
        #   columns = [k ; r_k]                                       (S+R, Dh)
        q2 = jnp.concatenate([rwq[:, sl], rrq[:, sl]], axis=0)            # bf16
        kc = jnp.concatenate([k_all[:, sl], rk[:, sl]], axis=0).astype(bf16)
        sc = jnp.einsum("qd,kd->qk", q2, kc,
                        preferred_element_type=f32)          # (2S, S+R) f32
        ac = sc[:seq, :seq]                                  # (q + r_w_bias) . k^T
        bd = _rel_shift_2d(sc[seq:, seq:])                   # rel-shifted (q+r_r_bias).rk^T

        score = ac + bd                    # NOTE: no softmax, exactly as in the module
        prob_ref[h, :, :] = score

        vecs.append(jnp.dot(score.astype(bf16), v_all[:, sl].astype(bf16),
                            preferred_element_type=f32))     # (S, Dh)

    attn_vec = jnp.concatenate(vecs, axis=1)                 # (S, H*Dh), head-major
    attn_out = jnp.dot(attn_vec.astype(bf16), wo_ref[...],
                       preferred_element_type=f32)           # (S, D)

    # post-lnorm residual + LayerNorm (f32 elementwise)
    x = _layernorm(w + attn_out, ln1g_ref[...], ln1b_ref[...])

    # PositionwiseFF: fc1 + QuickGELU, fc2, residual, LayerNorm (post-lnorm)
    hid = jnp.dot(x.astype(bf16), wff1_ref[...], preferred_element_type=f32)
    hid = hid * jax.nn.sigmoid(1.702 * hid)                  # QuickGELU, f32 (EUP)
    hid_ref[...] = hid
    core = jnp.dot(hid.astype(bf16), wff2_ref[...], preferred_element_type=f32)
    out_ref[...] = _layernorm(x + core, ln2g_ref[...], ln2b_ref[...])


# ------------------------------ pallas glue ----------------------------------
def _rep_spec(shape):
    # Full-array block, identical at every grid step (weights / shared inputs).
    nd = len(shape)
    return pl.BlockSpec(shape, lambda b, _nd=nd: (0,) * _nd)


@jax.jit
def decoder_layer_forward(dec_inp, r, r_w_bias, r_r_bias, params):
    S_, B_, D_ = dec_inp.shape
    R_ = r.shape[0]
    H, Dh = r_w_bias.shape
    d_inner = params["w_ff1"].shape[1]
    assert R_ == S_, "mems / rlen != qlen path not implemented"

    bf16 = jnp.bfloat16
    w_b = jnp.transpose(dec_inp, (1, 0, 2))          # (B, S, D): batch-major for the grid
    r_bf = r.astype(bf16)                            # only feeds the r_net matmul
    wqkv = params["w_qkv"].astype(bf16)
    wr = params["w_r"].astype(bf16)
    wo = params["w_o"].astype(bf16)
    wff1 = params["w_ff1"].astype(bf16)
    wff2 = params["w_ff2"].astype(bf16)
    rwb = r_w_bias.reshape(1, H * Dh)                # head-major flat, matches q layout
    rrb = r_r_bias.reshape(1, H * Dh)

    out_b, hid_b, prob_b = pl.pallas_call(
        _decoder_layer_kernel,
        grid=(B_,),
        in_specs=[
            pl.BlockSpec((None, S_, D_), lambda b: (b, 0, 0)),   # dec_inp, per batch
            _rep_spec((R_, D_)),                                 # r (bf16)
            _rep_spec((D_, 3 * H * Dh)),                         # w_qkv (bf16)
            _rep_spec((D_, H * Dh)),                             # w_r   (bf16)
            _rep_spec((1, H * Dh)),                              # r_w_bias (flat, f32)
            _rep_spec((1, H * Dh)),                              # r_r_bias (flat, f32)
            _rep_spec((H * Dh, D_)),                             # w_o   (bf16)
            _rep_spec((1, D_)),                                  # ln1 gamma
            _rep_spec((1, D_)),                                  # ln1 beta
            _rep_spec((D_, d_inner)),                            # w_ff1 (bf16)
            _rep_spec((d_inner, D_)),                            # w_ff2 (bf16)
            _rep_spec((1, D_)),                                  # ln2 gamma
            _rep_spec((1, D_)),                                  # ln2 beta
        ],
        out_specs=(
            pl.BlockSpec((None, S_, D_), lambda b: (b, 0, 0)),
            pl.BlockSpec((None, S_, d_inner), lambda b: (b, 0, 0)),
            pl.BlockSpec((None, H, S_, S_), lambda b: (b, 0, 0, 0)),
        ),
        out_shape=(
            jax.ShapeDtypeStruct((B_, S_, D_), jnp.float32),
            jax.ShapeDtypeStruct((B_, S_, d_inner), jnp.float32),
            jax.ShapeDtypeStruct((B_, H, S_, S_), jnp.float32),
        ),
        compiler_params=pltpu.CompilerParams(
            dimension_semantics=("parallel",),   # shards batch across v7x's 2 TCs
        ),
    )(w_b, r_bf, wqkv, wr, rwb, rrb, wo,
      params["ln1_g"], params["ln1_b"], wff1, wff2,
      params["ln2_g"], params["ln2_b"])

    # back to the torch layouts (tiny layout-only ops, outside the kernel)
    ff_output = jnp.transpose(out_b, (1, 0, 2))      # (S, B, D)
    core_output = jnp.transpose(hid_b, (1, 0, 2))    # (S, B, d_inner)
    attn_prob = jnp.transpose(prob_b, (2, 3, 0, 1))  # (qlen, klen, B, H)
    return ff_output, core_output, attn_prob


# ------------------------- pure-JAX reference --------------------------------
def reference_forward(dec_inp, r, r_w_bias, r_r_bias, params):
    P = lax.Precision.HIGHEST
    S_, B_, _ = dec_inp.shape
    H, Dh = r_w_bias.shape
    scale = 1.0 / (Dh ** 0.5)
    w_heads = jnp.einsum("ibd,df->ibf", dec_inp, params["w_qkv"], precision=P)
    r_head_k = jnp.einsum("rd,df->rf", r, params["w_r"], precision=P).reshape(S_, H, Dh)
    q, k, v = jnp.split(w_heads, 3, axis=-1)
    q = q.reshape(S_, B_, H, Dh)
    k = k.reshape(S_, B_, H, Dh)
    v = v.reshape(S_, B_, H, Dh)
    AC = jnp.einsum("ibnd,jbnd->ijbn", q + r_w_bias, k, precision=P)
    BD = jnp.einsum("ibnd,jnd->ijbn", q + r_r_bias, r_head_k, precision=P)
    # torch _rel_shift
    Q_, R_ = BD.shape[0], BD.shape[1]
    zero_pad = jnp.zeros((Q_, 1, B_, H), BD.dtype)
    xp = jnp.concatenate([zero_pad, BD], axis=1).reshape(R_ + 1, Q_, B_, H)
    BD = xp[1:].reshape(Q_, R_, B_, H)
    attn_prob = (AC + BD) * scale                       # no softmax, as in torch
    attn_vec = jnp.einsum("ijbn,jbnd->ibnd", attn_prob, v,
                          precision=P).reshape(S_, B_, H * Dh)
    attn_out = jnp.einsum("ibf,fd->ibd", attn_vec, params["w_o"], precision=P)
    x = _layernorm(dec_inp + attn_out, params["ln1_g"], params["ln1_b"])
    hid = jnp.einsum("ibd,df->ibf", x, params["w_ff1"], precision=P)
    hid = hid * jax.nn.sigmoid(1.702 * hid)
    core = jnp.einsum("ibf,fd->ibd", hid, params["w_ff2"], precision=P)
    out = _layernorm(x + core, params["ln2_g"], params["ln2_b"])
    return out, hid, attn_prob


# --------------------------------- main ---------------------------------------
if __name__ == "__main__":
    key = jax.random.PRNGKey(0)
    ks = jax.random.split(key, 13)
    nrm = jax.random.normal

    dec_inp = nrm(ks[0], (S, B, D_MODEL), jnp.float32)
    r = nrm(ks[1], (S, D_MODEL), jnp.float32)
    r_w_bias = 0.05 * nrm(ks[2], (N_HEAD, D_HEAD), jnp.float32)
    r_r_bias = 0.05 * nrm(ks[3], (N_HEAD, D_HEAD), jnp.float32)

    params = {
        "w_qkv": 0.05 * nrm(ks[4], (D_MODEL, 3 * N_HEAD * D_HEAD), jnp.float32),
        "w_r":   0.05 * nrm(ks[5], (D_MODEL, N_HEAD * D_HEAD), jnp.float32),
        "w_o":   0.05 * nrm(ks[6], (N_HEAD * D_HEAD, D_MODEL), jnp.float32),
        "ln1_g": jnp.ones((1, D_MODEL), jnp.float32) + 0.1 * nrm(ks[7], (1, D_MODEL), jnp.float32),
        "ln1_b": 0.1 * nrm(ks[8], (1, D_MODEL), jnp.float32),
        "w_ff1": 0.05 * nrm(ks[9], (D_MODEL, D_INNER), jnp.float32),
        "w_ff2": 0.05 * nrm(ks[10], (D_INNER, D_MODEL), jnp.float32),
        "ln2_g": jnp.ones((1, D_MODEL), jnp.float32) + 0.1 * nrm(ks[11], (1, D_MODEL), jnp.float32),
        "ln2_b": 0.1 * nrm(ks[12], (1, D_MODEL), jnp.float32),
    }

    ff_out, core_out, attn_prob = decoder_layer_forward(
        dec_inp, r, r_w_bias, r_r_bias, params)
    jax.block_until_ready((ff_out, core_out, attn_prob))

    ff_ref, core_ref, prob_ref = reference_forward(
        dec_inp, r, r_w_bias, r_r_bias, params)

    # bf16 MXU operands with f32 accumulation -> 2e-2 tolerance is comfortable here.
    np.testing.assert_allclose(np.asarray(ff_out), np.asarray(ff_ref),
                               rtol=2e-2, atol=2e-2)
    np.testing.assert_allclose(np.asarray(core_out), np.asarray(core_ref),
                               rtol=2e-2, atol=2e-2)
    np.testing.assert_allclose(np.asarray(attn_prob), np.asarray(prob_ref),
                               rtol=2e-2, atol=2e-2)

    assert ff_out.shape == (S, B, D_MODEL)
    assert core_out.shape == (S, B, D_INNER)
    assert attn_prob.shape == (S, S, B, N_HEAD)
    print("KERNEL_OK")
</pallas_src>

<mosaic_0001>
module attributes {stable_mosaic.version = 11 : i64} {
  func.func @_decoder_layer_kernel(%arg0: i32, %arg1: memref<1x8x32xf32, #tpu.memory_space<vmem>>, %arg2: memref<8x32xbf16, #tpu.memory_space<vmem>>, %arg3: memref<32x96xbf16, #tpu.memory_space<vmem>>, %arg4: memref<32x32xbf16, #tpu.memory_space<vmem>>, %arg5: memref<1x32xf32, #tpu.memory_space<vmem>>, %arg6: memref<1x32xf32, #tpu.memory_space<vmem>>, %arg7: memref<32x32xbf16, #tpu.memory_space<vmem>>, %arg8: memref<1x32xf32, #tpu.memory_space<vmem>>, %arg9: memref<1x32xf32, #tpu.memory_space<vmem>>, %arg10: memref<32x64xbf16, #tpu.memory_space<vmem>>, %arg11: memref<64x32xbf16, #tpu.memory_space<vmem>>, %arg12: memref<1x32xf32, #tpu.memory_space<vmem>>, %arg13: memref<1x32xf32, #tpu.memory_space<vmem>>, %arg14: memref<1x8x32xf32, #tpu.memory_space<vmem>>, %arg15: memref<1x8x64xf32, #tpu.memory_space<vmem>>, %arg16: memref<1x2x8x8xf32, #tpu.memory_space<vmem>>) attributes {dimension_semantics = [#tpu.dimension_semantics<parallel>], iteration_bounds = array<i64: 2>, scalar_prefetch = 0 : i64, scratch_operands = 0 : i64, tpu.core_type = #tpu.core_type<tc>, window_params = [{transform_indices = @transform_0, window_bounds = array<i64: 1, 8, 32>}, {pipeline_mode = #tpu.pipeline_mode<synchronous>, transform_indices = @transform_1, window_bounds = array<i64: 8, 32>}, {pipeline_mode = #tpu.pipeline_mode<synchronous>, transform_indices = @transform_2, window_bounds = array<i64: 32, 96>}, {pipeline_mode = #tpu.pipeline_mode<synchronous>, transform_indices = @transform_3, window_bounds = array<i64: 32, 32>}, {pipeline_mode = #tpu.pipeline_mode<synchronous>, transform_indices = @transform_4, window_bounds = array<i64: 1, 32>}, {pipeline_mode = #tpu.pipeline_mode<synchronous>, transform_indices = @transform_5, window_bounds = array<i64: 1, 32>}, {pipeline_mode = #tpu.pipeline_mode<synchronous>, transform_indices = @transform_6, window_bounds = array<i64: 32, 32>}, {pipeline_mode = #tpu.pipeline_mode<synchronous>, transform_indices = @transform_7, window_bounds = array<i64: 1, 32>}, {pipeline_mode = #tpu.pipeline_mode<synchronous>, transform_indices = @transform_8, window_bounds = array<i64: 1, 32>}, {pipeline_mode = #tpu.pipeline_mode<synchronous>, transform_indices = @transform_9, window_bounds = array<i64: 32, 64>}, {pipeline_mode = #tpu.pipeline_mode<synchronous>, transform_indices = @transform_10, window_bounds = array<i64: 64, 32>}, {pipeline_mode = #tpu.pipeline_mode<synchronous>, transform_indices = @transform_11, window_bounds = array<i64: 1, 32>}, {pipeline_mode = #tpu.pipeline_mode<synchronous>, transform_indices = @transform_12, window_bounds = array<i64: 1, 32>}, {transform_indices = @transform_13, window_bounds = array<i64: 1, 8, 32>}, {transform_indices = @transform_14, window_bounds = array<i64: 1, 8, 64>}, {transform_indices = @transform_15, window_bounds = array<i64: 1, 2, 8, 8>}]} {
    %c0 = arith.constant 0 : index
    %c0_0 = arith.constant 0 : index
    %c0_1 = arith.constant 0 : index
    %0 = vector.load %arg1[%c0, %c0_0, %c0_1] : memref<1x8x32xf32, #tpu.memory_space<vmem>>, vector<1x8x32xf32>
    %1 = vector.shape_cast %0 : vector<1x8x32xf32> to vector<8x32xf32>
    %2 = arith.truncf %1 : vector<8x32xf32> to vector<8x32xbf16>
    %c0_2 = arith.constant 0 : index
    %c0_3 = arith.constant 0 : index
    %3 = vector.load %arg3[%c0_2, %c0_3] : memref<32x96xbf16, #tpu.memory_space<vmem>>, vector<32x96xbf16>
    %cst = arith.constant dense<0.000000e+00> : vector<8x96xf32>
    %4 = tpu.matmul %2, %3, %cst {dimension_numbers = #tpu.dot_dimension_numbers<[1], [0], [0], [1], [0, 0, 1, 1], [], []>} : vector<8x32xbf16>, vector<32x96xbf16>, vector<8x96xf32> -> vector<8x96xf32>
    %c0_4 = arith.constant 0 : index
    %c0_5 = arith.constant 0 : index
    %5 = vector.load %arg2[%c0_4, %c0_5] : memref<8x32xbf16, #tpu.memory_space<vmem>>, vector<8x32xbf16>
    %c0_6 = arith.constant 0 : index
    %c0_7 = arith.constant 0 : index
    %6 = vector.load %arg4[%c0_6, %c0_7] : memref<32x32xbf16, #tpu.memory_space<vmem>>, vector<32x32xbf16>
    %cst_8 = arith.constant dense<0.000000e+00> : vector<8x32xf32>
    %7 = tpu.matmul %5, %6, %cst_8 {dimension_numbers = #tpu.dot_dimension_numbers<[1], [0], [0], [1], [0, 0, 1, 1], [], []>} : vector<8x32xbf16>, vector<32x32xbf16>, vector<8x32xf32> -> vector<8x32xf32>
    %8 = vector.extract_strided_slice %4 {offsets = [0, 0], sizes = [8, 32], strides = [1, 1]} : vector<8x96xf32> to vector<8x32xf32>
    %9 = vector.extract_strided_slice %4 {offsets = [0, 32], sizes = [8, 32], strides = [1, 1]} : vector<8x96xf32> to vector<8x32xf32>
    %10 = vector.extract_strided_slice %4 {offsets = [0, 64], sizes = [8, 32], strides = [1, 1]} : vector<8x96xf32> to vector<8x32xf32>
    %c0_9 = arith.constant 0 : index
    %c0_10 = arith.constant 0 : index
    %11 = vector.load %arg5[%c0_9, %c0_10] : memref<1x32xf32, #tpu.memory_space<vmem>>, vector<1x32xf32>
    %12 = vector.broadcast %11 : vector<1x32xf32> to vector<8x32xf32>
    %13 = arith.addf %8, %12 : vector<8x32xf32>
    %cst_11 = arith.constant 2.500000e-01 : f32
    %14 = vector.broadcast %cst_11 : f32 to vector<8x32xf32>
    %15 = arith.mulf %13, %14 : vector<8x32xf32>
    %16 = arith.truncf %15 : vector<8x32xf32> to vector<8x32xbf16>
    %c0_12 = arith.constant 0 : index
    %c0_13 = arith.constant 0 : index
    %17 = vector.load %arg6[%c0_12, %c0_13] : memref<1x32xf32, #tpu.memory_space<vmem>>, vector<1x32xf32>
    %18 = vector.broadcast %17 : vector<1x32xf32> to vector<8x32xf32>
    %19 = arith.addf %8, %18 : vector<8x32xf32>
    %cst_14 = arith.constant 2.500000e-01 : f32
    %20 = vector.broadcast %cst_14 : f32 to vector<8x32xf32>
    %21 = arith.mulf %19, %20 : vector<8x32xf32>
    %22 = arith.truncf %21 : vector<8x32xf32> to vector<8x32xbf16>
    %23 = vector.extract_strided_slice %16 {offsets = [0, 0], sizes = [8, 16], strides = [1, 1]} : vector<8x32xbf16> to vector<8x16xbf16>
    %24 = vector.extract_strided_slice %22 {offsets = [0, 0], sizes = [8, 16], strides = [1, 1]} : vector<8x32xbf16> to vector<8x16xbf16>
    %25 = tpu.concatenate %23, %24 in 0 : vector<8x16xbf16>, vector<8x16xbf16> -> vector<16x16xbf16>
    %26 = vector.extract_strided_slice %9 {offsets = [0, 0], sizes = [8, 16], strides = [1, 1]} : vector<8x32xf32> to vector<8x16xf32>
    %27 = vector.extract_strided_slice %7 {offsets = [0, 0], sizes = [8, 16], strides = [1, 1]} : vector<8x32xf32> to vector<8x16xf32>
    %28 = tpu.concatenate %26, %27 in 0 : vector<8x16xf32>, vector<8x16xf32> -> vector<16x16xf32>
    %29 = arith.truncf %28 : vector<16x16xf32> to vector<16x16xbf16>
    "tpu.trace_start"() <{level = 10 : i32, message = "qd,kd->qk"}> : () -> ()
    %cst_15 = arith.constant dense<0.000000e+00> : vector<16x16xf32>
    %30 = tpu.matmul %25, %29, %cst_15 {dimension_numbers = #tpu.dot_dimension_numbers<[1], [1], [0], [0], [0, 0, 1, 0], [], []>} : vector<16x16xbf16>, vector<16x16xbf16>, vector<16x16xf32> -> vector<16x16xf32>
    "tpu.trace_stop"() : () -> ()
    %31 = vector.extract_strided_slice %30 {offsets = [0, 0], sizes = [8, 8], strides = [1, 1]} : vector<16x16xf32> to vector<8x8xf32>
    %32 = vector.extract_strided_slice %30 {offsets = [8, 8], sizes = [8, 8], strides = [1, 1]} : vector<16x16xf32> to vector<8x8xf32>
    %cst_16 = arith.constant 0.000000e+00 : f32
    %33 = vector.broadcast %cst_16 : f32 to vector<1x1xf32>
    %34 = vector.extract_strided_slice %32 {offsets = [0, 7], sizes = [1, 1], strides = [1, 1]} : vector<8x8xf32> to vector<1x1xf32>
    %35 = vector.extract_strided_slice %32 {offsets = [1, 0], sizes = [1, 6], strides = [1, 1]} : vector<8x8xf32> to vector<1x6xf32>
    %36 = tpu.concatenate %34, %33, %35 in 1 : vector<1x1xf32>, vector<1x1xf32>, vector<1x6xf32> -> vector<1x8xf32>
    %37 = vector.extract_strided_slice %32 {offsets = [1, 6], sizes = [1, 2], strides = [1, 1]} : vector<8x8xf32> to vector<1x2xf32>
    %38 = vector.extract_strided_slice %32 {offsets = [2, 0], sizes = [1, 5], strides = [1, 1]} : vector<8x8xf32> to vector<1x5xf32>
    %39 = tpu.concatenate %37, %33, %38 in 1 : vector<1x2xf32>, vector<1x1xf32>, vector<1x5xf32> -> vector<1x8xf32>
    %40 = vector.extract_strided_slice %32 {offsets = [2, 5], sizes = [1, 3], strides = [1, 1]} : vector<8x8xf32> to vector<1x3xf32>
    %41 = vector.extract_strided_slice %32 {offsets = [3, 0], sizes = [1, 4], strides = [1, 1]} : vector<8x8xf32> to vector<1x4xf32>
    %42 = tpu.concatenate %40, %33, %41 in 1 : vector<1x3xf32>, vector<1x1xf32>, vector<1x4xf32> -> vector<1x8xf32>
    %43 = vector.extract_strided_slice %32 {offsets = [3, 4], sizes = [1, 4], strides = [1, 1]} : vector<8x8xf32> to vector<1x4xf32>
    %44 = vector.extract_strided_slice %32 {offsets = [4, 0], sizes = [1, 3], strides = [1, 1]} : vector<8x8xf32> to vector<1x3xf32>
    %45 = tpu.concatenate %43, %33, %44 in 1 : vector<1x4xf32>, vector<1x1xf32>, vector<1x3xf32> -> vector<1x8xf32>
    %46 = vector.extract_strided_slice %32 {offsets = [4, 3], sizes = [1, 5], strides = [1, 1]} : vector<8x8xf32> to vector<1x5xf32>
    %47 = vector.extract_strided_slice %32 {offsets = [5, 0], sizes = [1, 2], strides = [1, 1]} : vector<8x8xf32> to vector<1x2xf32>
    %48 = tpu.concatenate %46, %33, %47 in 1 : vector<1x5xf32>, vector<1x1xf32>, vector<1x2xf32> -> vector<1x8xf32>
    %49 = vector.extract_strided_slice %32 {offsets = [5, 2], sizes = [1, 6], strides = [1, 1]} : vector<8x8xf32> to vector<1x6xf32>
    %50 = vector.extract_strided_slice %32 {offsets = [6, 0], sizes = [1, 1], strides = [1, 1]} : vector<8x8xf32> to vector<1x1xf32>
    %51 = tpu.concatenate %49, %33, %50 in 1 : vector<1x6xf32>, vector<1x1xf32>, vector<1x1xf32> -> vector<1x8xf32>
    %52 = vector.extract_strided_slice %32 {offsets = [6, 1], sizes = [1, 7], strides = [1, 1]} : vector<8x8xf32> to vector<1x7xf32>
    %53 = tpu.concatenate %52, %33 in 1 : vector<1x7xf32>, vector<1x1xf32> -> vector<1x8xf32>
    %54 = vector.extract_strided_slice %32 {offsets = [7, 0], sizes = [1, 8], strides = [1, 1]} : vector<8x8xf32> to vector<1x8xf32>
    %55 = tpu.concatenate %36, %39, %42, %45, %48, %51, %53, %54 in 0 : vector<1x8xf32>, vector<1x8xf32>, vector<1x8xf32>, vector<1x8xf32>, vector<1x8xf32>, vector<1x8xf32>, vector<1x8xf32>, vector<1x8xf32> -> vector<8x8xf32>
    %56 = arith.addf %31, %55 : vector<8x8xf32>
    %c0_17 = arith.constant 0 : index
    %c0_18 = arith.constant 0 : index
    %c0_19 = arith.constant 0 : index
    %c0_20 = arith.constant 0 : index
    %57 = vector.load %arg16[%c0_17, %c0_18, %c0_19, %c0_20] : memref<1x2x8x8xf32, #tpu.memory_space<vmem>>, vector<1x1x8x8xf32>
    %58 = vector.shape_cast %57 : vector<1x1x8x8xf32> to vector<8x8xf32>
    %59 = vector.shape_cast %56 : vector<8x8xf32> to vector<1x1x8x8xf32>
    tpu.vector_store %arg16[%c0_17, %c0_18, %c0_19, %c0_20], %59 {strides = array<i32>} : memref<1x2x8x8xf32, #tpu.memory_space<vmem>>, vector<1x1x8x8xf32>,
    %60 = arith.truncf %56 : vector<8x8xf32> to vector<8x8xbf16>
    %61 = vector.extract_strided_slice %10 {offsets = [0, 0], sizes = [8, 16], strides = [1, 1]} : vector<8x32xf32> to vector<8x16xf32>
    %62 = arith.truncf %61 : vector<8x16xf32> to vector<8x16xbf16>
    %cst_21 = arith.constant dense<0.000000e+00> : vector<8x16xf32>
    %63 = tpu.matmul %60, %62, %cst_21 {dimension_numbers = #tpu.dot_dimension_numbers<[1], [0], [0], [1], [0, 0, 1, 1], [], []>} : vector<8x8xbf16>, vector<8x16xbf16>, vector<8x16xf32> -> vector<8x16xf32>
    %64 = vector.extract_strided_slice %16 {offsets = [0, 16], sizes = [8, 16], strides = [1, 1]} : vector<8x32xbf16> to vector<8x16xbf16>
    %65 = vector.extract_strided_slice %22 {offsets = [0, 16], sizes = [8, 16], strides = [1, 1]} : vector<8x32xbf16> to vector<8x16xbf16>
    %66 = tpu.concatenate %64, %65 in 0 : vector<8x16xbf16>, vector<8x16xbf16> -> vector<16x16xbf16>
    %67 = vector.extract_strided_slice %9 {offsets = [0, 16], sizes = [8, 16], strides = [1, 1]} : vector<8x32xf32> to vector<8x16xf32>
    %68 = vector.extract_strided_slice %7 {offsets = [0, 16], sizes = [8, 16], strides = [1, 1]} : vector<8x32xf32> to vector<8x16xf32>
    %69 = tpu.concatenate %67, %68 in 0 : vector<8x16xf32>, vector<8x16xf32> -> vector<16x16xf32>
    %70 = arith.truncf %69 : vector<16x16xf32> to vector<16x16xbf16>
    "tpu.trace_start"() <{level = 10 : i32, message = "qd,kd->qk"}> : () -> ()
    %cst_22 = arith.constant dense<0.000000e+00> : vector<16x16xf32>
    %71 = tpu.matmul %66, %70, %cst_22 {dimension_numbers = #tpu.dot_dimension_numbers<[1], [1], [0], [0], [0, 0, 1, 0], [], []>} : vector<16x16xbf16>, vector<16x16xbf16>, vector<16x16xf32> -> vector<16x16xf32>
    "tpu.trace_stop"() : () -> ()
    %72 = vector.extract_strided_slice %71 {offsets = [0, 0], sizes = [8, 8], strides = [1, 1]} : vector<16x16xf32> to vector<8x8xf32>
    %73 = vector.extract_strided_slice %71 {offsets = [8, 8], sizes = [8, 8], strides = [1, 1]} : vector<16x16xf32> to vector<8x8xf32>
    %cst_23 = arith.constant 0.000000e+00 : f32
    %74 = vector.broadcast %cst_23 : f32 to vector<1x1xf32>
    %75 = vector.extract_strided_slice %73 {offsets = [0, 7], sizes = [1, 1], strides = [1, 1]} : vector<8x8xf32> to vector<1x1xf32>
    %76 = vector.extract_strided_slice %73 {offsets = [1, 0], sizes = [1, 6], strides = [1, 1]} : vector<8x8xf32> to vector<1x6xf32>
    %77 = tpu.concatenate %75, %74, %76 in 1 : vector<1x1xf32>, vector<1x1xf32>, vector<1x6xf32> -> vector<1x8xf32>
    %78 = vector.extract_strided_slice %73 {offsets = [1, 6], sizes = [1, 2], strides = [1, 1]} : vector<8x8xf32> to vector<1x2xf32>
    %79 = vector.extract_strided_slice %73 {offsets = [2, 0], sizes = [1, 5], strides = [1, 1]} : vector<8x8xf32> to vector<1x5xf32>
    %80 = tpu.concatenate %78, %74, %79 in 1 : vector<1x2xf32>, vector<1x1xf32>, vector<1x5xf32> -> vector<1x8xf32>
    %81 = vector.extract_strided_slice %73 {offsets = [2, 5], sizes = [1, 3], strides = [1, 1]} : vector<8x8xf32> to vector<1x3xf32>
    %82 = vector.extract_strided_slice %73 {offsets = [3, 0], sizes = [1, 4], strides = [1, 1]} : vector<8x8xf32> to vector<1x4xf32>
    %83 = tpu.concatenate %81, %74, %82 in 1 : vector<1x3xf32>, vector<1x1xf32>, vector<1x4xf32> -> vector<1x8xf32>
    %84 = vector.extract_strided_slice %73 {offsets = [3, 4], sizes = [1, 4], strides = [1, 1]} : vector<8x8xf32> to vector<1x4xf32>
    %85 = vector.extract_strided_slice %73 {offsets = [4, 0], sizes = [1, 3], strides = [1, 1]} : vector<8x8xf32> to vector<1x3xf32>
    %86 = tpu.concatenate %84, %74, %85 in 1 : vector<1x4xf32>, vector<1x1xf32>, vector<1x3xf32> -> vector<1x8xf32>
    %87 = vector.extract_strided_slice %73 {offsets = [4, 3], sizes = [1, 5], strides = [1, 1]} : vector<8x8xf32> to vector<1x5xf32>
    %88 = vector.extract_strided_slice %73 {offsets = [5, 0], sizes = [1, 2], strides = [1, 1]} : vector<8x8xf32> to vector<1x2xf32>
    %89 = tpu.concatenate %87, %74, %88 in 1 : vector<1x5xf32>, vector<1x1xf32>, vector<1x2xf32> -> vector<1x8xf32>
    %90 = vector.extract_strided_slice %73 {offsets = [5, 2], sizes = [1, 6], strides = [1, 1]} : vector<8x8xf32> to vector<1x6xf32>
    %91 = vector.extract_strided_slice %73 {offsets = [6, 0], sizes = [1, 1], strides = [1, 1]} : vector<8x8xf32> to vector<1x1xf32>
    %92 = tpu.concatenate %90, %74, %91 in 1 : vector<1x6xf32>, vector<1x1xf32>, vector<1x1xf32> -> vector<1x8xf32>
    %93 = vector.extract_strided_slice %73 {offsets = [6, 1], sizes = [1, 7], strides = [1, 1]} : vector<8x8xf32> to vector<1x7xf32>
    %94 = tpu.concatenate %93, %74 in 1 : vector<1x7xf32>, vector<1x1xf32> -> vector<1x8xf32>
    %95 = vector.extract_strided_slice %73 {offsets = [7, 0], sizes = [1, 8], strides = [1, 1]} : vector<8x8xf32> to vector<1x8xf32>
    %96 = tpu.concatenate %77, %80, %83, %86, %89, %92, %94, %95 in 0 : vector<1x8xf32>, vector<1x8xf32>, vector<1x8xf32>, vector<1x8xf32>, vector<1x8xf32>, vector<1x8xf32>, vector<1x8xf32>, vector<1x8xf32> -> vector<8x8xf32>
    %97 = arith.addf %72, %96 : vector<8x8xf32>
    %c0_24 = arith.constant 0 : index
    %c1 = arith.constant 1 : index
    %c0_25 = arith.constant 0 : index
    %c0_26 = arith.constant 0 : index
    %98 = vector.load %arg16[%c0_24, %c1, %c0_25, %c0_26] : memref<1x2x8x8xf32, #tpu.memory_space<vmem>>, vector<1x1x8x8xf32>
    %99 = vector.shape_cast %98 : vector<1x1x8x8xf32> to vector<8x8xf32>
    %100 = vector.shape_cast %97 : vector<8x8xf32> to vector<1x1x8x8xf32>
    tpu.vector_store %arg16[%c0_24, %c1, %c0_25, %c0_26], %100 {strides = array<i32>} : memref<1x2x8x8xf32, #tpu.memory_space<vmem>>, vector<1x1x8x8xf32>,
    %101 = arith.truncf %97 : vector<8x8xf32> to vector<8x8xbf16>
    %102 = vector.extract_strided_slice %10 {offsets = [0, 16], sizes = [8, 16], strides = [1, 1]} : vector<8x32xf32> to vector<8x16xf32>
    %103 = arith.truncf %102 : vector<8x16xf32> to vector<8x16xbf16>
    %cst_27 = arith.constant dense<0.000000e+00> : vector<8x16xf32>
    %104 = tpu.matmul %101, %103, %cst_27 {dimension_numbers = #tpu.dot_dimension_numbers<[1], [0], [0], [1], [0, 0, 1, 1], [], []>} : vector<8x8xbf16>, vector<8x16xbf16>, vector<8x16xf32> -> vector<8x16xf32>
    %105 = tpu.concatenate %63, %104 in 1 : vector<8x16xf32>, vector<8x16xf32> -> vector<8x32xf32>
    %106 = arith.truncf %105 : vector<8x32xf32> to vector<8x32xbf16>
    %c0_28 = arith.constant 0 : index
    %c0_29 = arith.constant 0 : index
    %107 = vector.load %arg7[%c0_28, %c0_29] : memref<32x32xbf16, #tpu.memory_space<vmem>>, vector<32x32xbf16>
    %cst_30 = arith.constant dense<0.000000e+00> : vector<8x32xf32>
    %108 = tpu.matmul %106, %107, %cst_30 {dimension_numbers = #tpu.dot_dimension_numbers<[1], [0], [0], [1], [0, 0, 1, 1], [], []>} : vector<8x32xbf16>, vector<32x32xbf16>, vector<8x32xf32> -> vector<8x32xf32>
    %109 = arith.addf %1, %108 : vector<8x32xf32>
    %c0_31 = arith.constant 0 : index
    %c0_32 = arith.constant 0 : index
    %110 = vector.load %arg8[%c0_31, %c0_32] : memref<1x32xf32, #tpu.memory_space<vmem>>, vector<1x32xf32>
    %c0_33 = arith.constant 0 : index
    %c0_34 = arith.constant 0 : index
    %111 = vector.load %arg9[%c0_33, %c0_34] : memref<1x32xf32, #tpu.memory_space<vmem>>, vector<1x32xf32>
    %cst_35 = arith.constant dense<0.000000e+00> : vector<8xf32>
    %112 = vector.multi_reduction <add>, %109, %cst_35 [1] : vector<8x32xf32> to vector<8xf32>
    %113 = vector.shape_cast %112 : vector<8xf32> to vector<8x1xf32>
    %cst_36 = arith.constant 3.200000e+01 : f32
    %114 = vector.broadcast %cst_36 : f32 to vector<8x1xf32>
    %115 = arith.divf %113, %114 : vector<8x1xf32>
    %116 = vector.broadcast %115 : vector<8x1xf32> to vector<8x32xf32>
    %117 = arith.subf %109, %116 : vector<8x32xf32>
    %118 = arith.mulf %117, %117 : vector<8x32xf32>
    %cst_37 = arith.constant dense<0.000000e+00> : vector<8xf32>
    %119 = vector.multi_reduction <add>, %118, %cst_37 [1] : vector<8x32xf32> to vector<8xf32>
    %120 = vector.shape_cast %119 : vector<8xf32> to vector<8x1xf32>
    %cst_38 = arith.constant 3.200000e+01 : f32
    %121 = vector.broadcast %cst_38 : f32 to vector<8x1xf32>
    %122 = arith.divf %120, %121 : vector<8x1xf32>
    %123 = vector.broadcast %115 : vector<8x1xf32> to vector<8x32xf32>
    %124 = arith.subf %109, %123 : vector<8x32xf32>
    %cst_39 = arith.constant 9.99999974E-6 : f32
    %125 = vector.broadcast %cst_39 : f32 to vector<8x1xf32>
    %126 = arith.addf %122, %125 : vector<8x1xf32>
    %127 = math.rsqrt %126 : vector<8x1xf32>
    %128 = vector.broadcast %127 : vector<8x1xf32> to vector<8x32xf32>
    %129 = arith.mulf %124, %128 : vector<8x32xf32>
    %130 = vector.broadcast %110 : vector<1x32xf32> to vector<8x32xf32>
    %131 = arith.mulf %129, %130 : vector<8x32xf32>
    %132 = vector.broadcast %111 : vector<1x32xf32> to vector<8x32xf32>
    %133 = arith.addf %131, %132 : vector<8x32xf32>
    %134 = arith.truncf %133 : vector<8x32xf32> to vector<8x32xbf16>
    %c0_40 = arith.constant 0 : index
    %c0_41 = arith.constant 0 : index
    %135 = vector.load %arg10[%c0_40, %c0_41] : memref<32x64xbf16, #tpu.memory_space<vmem>>, vector<32x64xbf16>
    %cst_42 = arith.constant dense<0.000000e+00> : vector<8x64xf32>
    %136 = tpu.matmul %134, %135, %cst_42 {dimension_numbers = #tpu.dot_dimension_numbers<[1], [0], [0], [1], [0, 0, 1, 1], [], []>} : vector<8x32xbf16>, vector<32x64xbf16>, vector<8x64xf32> -> vector<8x64xf32>
    %cst_43 = arith.constant 1.702000e+00 : f32
    %137 = vector.broadcast %cst_43 : f32 to vector<8x64xf32>
    %138 = arith.mulf %137, %136 : vector<8x64xf32>
    %139 = arith.negf %138 : vector<8x64xf32>
    %140 = math.exp %139 : vector<8x64xf32>
    %cst_44 = arith.constant 1.000000e+00 : f32
    %141 = vector.broadcast %cst_44 : f32 to vector<8x64xf32>
    %142 = arith.addf %141, %140 : vector<8x64xf32>
    %143 = arith.divf %141, %142 : vector<8x64xf32>
    %144 = arith.mulf %136, %143 : vector<8x64xf32>
    %c0_45 = arith.constant 0 : index
    %c0_46 = arith.constant 0 : index
    %c0_47 = arith.constant 0 : index
    %145 = vector.load %arg15[%c0_45, %c0_46, %c0_47] : memref<1x8x64xf32, #tpu.memory_space<vmem>>, vector<1x8x64xf32>
    %146 = vector.shape_cast %145 : vector<1x8x64xf32> to vector<8x64xf32>
    %147 = vector.shape_cast %144 : vector<8x64xf32> to vector<1x8x64xf32>
    tpu.vector_store %arg15[%c0_45, %c0_46, %c0_47], %147 {strides = array<i32>} : memref<1x8x64xf32, #tpu.memory_space<vmem>>, vector<1x8x64xf32>,
    %148 = arith.truncf %144 : vector<8x64xf32> to vector<8x64xbf16>
    %c0_48 = arith.constant 0 : index
    %c0_49 = arith.constant 0 : index
    %149 = vector.load %arg11[%c0_48, %c0_49] : memref<64x32xbf16, #tpu.memory_space<vmem>>, vector<64x32xbf16>
    %cst_50 = arith.constant dense<0.000000e+00> : vector<8x32xf32>
    %150 = tpu.matmul %148, %149, %cst_50 {dimension_numbers = #tpu.dot_dimension_numbers<[1], [0], [0], [1], [0, 0, 1, 1], [], []>} : vector<8x64xbf16>, vector<64x32xbf16>, vector<8x32xf32> -> vector<8x32xf32>
    %151 = arith.addf %133, %150 : vector<8x32xf32>
    %c0_51 = arith.constant 0 : index
    %c0_52 = arith.constant 0 : index
    %152 = vector.load %arg12[%c0_51, %c0_52] : memref<1x32xf32, #tpu.memory_space<vmem>>, vector<1x32xf32>
    %c0_53 = arith.constant 0 : index
    %c0_54 = arith.constant 0 : index
    %153 = vector.load %arg13[%c0_53, %c0_54] : memref<1x32xf32, #tpu.memory_space<vmem>>, vector<1x32xf32>
    %cst_55 = arith.constant dense<0.000000e+00> : vector<8xf32>
    %154 = vector.multi_reduction <add>, %151, %cst_55 [1] : vector<8x32xf32> to vector<8xf32>
    %155 = vector.shape_cast %154 : vector<8xf32> to vector<8x1xf32>
    %cst_56 = arith.constant 3.200000e+01 : f32
    %156 = vector.broadcast %cst_56 : f32 to vector<8x1xf32>
    %157 = arith.divf %155, %156 : vector<8x1xf32>
    %158 = vector.broadcast %157 : vector<8x1xf32> to vector<8x32xf32>
    %159 = arith.subf %151, %158 : vector<8x32xf32>
    %160 = arith.mulf %159, %159 : vector<8x32xf32>
    %cst_57 = arith.constant dense<0.000000e+00> : vector<8xf32>
    %161 = vector.multi_reduction <add>, %160, %cst_57 [1] : vector<8x32xf32> to vector<8xf32>
    %162 = vector.shape_cast %161 : vector<8xf32> to vector<8x1xf32>
    %cst_58 = arith.constant 3.200000e+01 : f32
    %163 = vector.broadcast %cst_58 : f32 to vector<8x1xf32>
    %164 = arith.divf %162, %163 : vector<8x1xf32>
    %165 = vector.broadcast %157 : vector<8x1xf32> to vector<8x32xf32>
    %166 = arith.subf %151, %165 : vector<8x32xf32>
    %cst_59 = arith.constant 9.99999974E-6 : f32
    %167 = vector.broadcast %cst_59 : f32 to vector<8x1xf32>
    %168 = arith.addf %164, %167 : vector<8x1xf32>
    %169 = math.rsqrt %168 : vector<8x1xf32>
    %170 = vector.broadcast %169 : vector<8x1xf32> to vector<8x32xf32>
    %171 = arith.mulf %166, %170 : vector<8x32xf32>
    %172 = vector.broadcast %152 : vector<1x32xf32> to vector<8x32xf32>
    %173 = arith.mulf %171, %172 : vector<8x32xf32>
    %174 = vector.broadcast %153 : vector<1x32xf32> to vector<8x32xf32>
    %175 = arith.addf %173, %174 : vector<8x32xf32>
    %c0_60 = arith.constant 0 : index
    %c0_61 = arith.constant 0 : index
    %c0_62 = arith.constant 0 : index
    %176 = vector.load %arg14[%c0_60, %c0_61, %c0_62] : memref<1x8x32xf32, #tpu.memory_space<vmem>>, vector<1x8x32xf32>
    %177 = vector.shape_cast %176 : vector<1x8x32xf32> to vector<8x32xf32>
    %178 = vector.shape_cast %175 : vector<8x32xf32> to vector<1x8x32xf32>
    tpu.vector_store %arg14[%c0_60, %c0_61, %c0_62], %178 {strides = array<i32>} : memref<1x8x32xf32, #tpu.memory_space<vmem>>, vector<1x8x32xf32>,
    return
  }
  func.func @transform_0(%arg0: i32) -> (i32, i32, i32) {
    %c0_i32 = arith.constant 0 : i32
    %c0_i32_0 = arith.constant 0 : i32
    %c0_i32_1 = arith.constant 0 : i32
    return %arg0, %c0_i32, %c0_i32_0 : i32, i32, i32
  }
  func.func @transform_1(%arg0: i32) -> (i32, i32) {
    %c0_i32 = arith.constant 0 : i32
    %c0_i32_0 = arith.constant 0 : i32
    %c0_i32_1 = arith.constant 0 : i32
    return %c0_i32, %c0_i32_0 : i32, i32
  }
  func.func @transform_2(%arg0: i32) -> (i32, i32) {
    %c0_i32 = arith.constant 0 : i32
    %c0_i32_0 = arith.constant 0 : i32
    %c0_i32_1 = arith.constant 0 : i32
    return %c0_i32, %c0_i32_0 : i32, i32
  }
  func.func @transform_3(%arg0: i32) -> (i32, i32) {
    %c0_i32 = arith.constant 0 : i32
    %c0_i32_0 = arith.constant 0 : i32
    %c0_i32_1 = arith.constant 0 : i32
    return %c0_i32, %c0_i32_0 : i32, i32
  }
  func.func @transform_4(%arg0: i32) -> (i32, i32) {
    %c0_i32 = arith.constant 0 : i32
    %c0_i32_0 = arith.constant 0 : i32
    %c0_i32_1 = arith.constant 0 : i32
    return %c0_i32, %c0_i32_0 : i32, i32
  }
  func.func @transform_5(%arg0: i32) -> (i32, i32) {
    %c0_i32 = arith.constant 0 : i32
    %c0_i32_0 = arith.constant 0 : i32
    %c0_i32_1 = arith.constant 0 : i32
    return %c0_i32, %c0_i32_0 : i32, i32
  }
  func.func @transform_6(%arg0: i32) -> (i32, i32) {
    %c0_i32 = arith.constant 0 : i32
    %c0_i32_0 = arith.constant 0 : i32
    %c0_i32_1 = arith.constant 0 : i32
    return %c0_i32, %c0_i32_0 : i32, i32
  }
  func.func @transform_7(%arg0: i32) -> (i32, i32) {
    %c0_i32 = arith.constant 0 : i32
    %c0_i32_0 = arith.constant 0 : i32
    %c0_i32_1 = arith.constant 0 : i32
    return %c0_i32, %c0_i32_0 : i32, i32
  }
  func.func @transform_8(%arg0: i32) -> (i32, i32) {
    %c0_i32 = arith.constant 0 : i32
    %c0_i32_0 = arith.constant 0 : i32
    %c0_i32_1 = arith.constant 0 : i32
    return %c0_i32, %c0_i32_0 : i32, i32
  }
  func.func @transform_9(%arg0: i32) -> (i32, i32) {
    %c0_i32 = arith.constant 0 : i32
    %c0_i32_0 = arith.constant 0 : i32
    %c0_i32_1 = arith.constant 0 : i32
    return %c0_i32, %c0_i32_0 : i32, i32
  }
  func.func @transform_10(%arg0: i32) -> (i32, i32) {
    %c0_i32 = arith.constant 0 : i32
    %c0_i32_0 = arith.constant 0 : i32
    %c0_i32_1 = arith.constant 0 : i32
    return %c0_i32, %c0_i32_0 : i32, i32
  }
  func.func @transform_11(%arg0: i32) -> (i32, i32) {
    %c0_i32 = arith.constant 0 : i32
    %c0_i32_0 = arith.constant 0 : i32
    %c0_i32_1 = arith.constant 0 : i32
    return %c0_i32, %c0_i32_0 : i32, i32
  }
  func.func @transform_12(%arg0: i32) -> (i32, i32) {
    %c0_i32 = arith.constant 0 : i32
    %c0_i32_0 = arith.constant 0 : i32
    %c0_i32_1 = arith.constant 0 : i32
    return %c0_i32, %c0_i32_0 : i32, i32
  }
  func.func @transform_13(%arg0: i32) -> (i32, i32, i32) {
    %c0_i32 = arith.constant 0 : i32
    %c0_i32_0 = arith.constant 0 : i32
    %c0_i32_1 = arith.constant 0 : i32
    return %arg0, %c0_i32, %c0_i32_0 : i32, i32, i32
  }
  func.func @transform_14(%arg0: i32) -> (i32, i32, i32) {
    %c0_i32 = arith.constant 0 : i32
    %c0_i32_0 = arith.constant 0 : i32
    %c0_i32_1 = arith.constant 0 : i32
    return %arg0, %c0_i32, %c0_i32_0 : i32, i32, i32
  }
  func.func @transform_15(%arg0: i32) -> (i32, i32, i32, i32) {
    %c0_i32 = arith.constant 0 : i32
    %c0_i32_0 = arith.constant 0 : i32
    %c0_i32_1 = arith.constant 0 : i32
    %c0_i32_2 = arith.constant 0 : i32
    return %arg0, %c0_i32, %c0_i32_0, %c0_i32_1 : i32, i32, i32, i32
  }
}

</mosaic_0001>

<llo_original>
// kernel: decoder_layer_forward.1
$region0: #{decoder_layer_forward.1}
  #allocation0 [shape = 'u32[]', space=smem, size = 0x4, offset = 0x4, fixed_abs, tag = 'smem constant byte address 0x4 - core index']
  #allocation1 [shape = 'u32[144,128]{1,0:T(1,128)}', space=vmem, size = 0x12000, scoped, tag = 'internal scratch']
  %s0 = inlined_call_operand.vmem [shape: f32[2,8,32], index: 0, kind: input, shape index: {}]
  %s1 = inlined_call_operand.vmem [shape: bf16[8,32], index: 1, kind: input, shape index: {}]
  %s2 = inlined_call_operand.vmem [shape: bf16[32,96], index: 2, kind: input, shape index: {}]
  %s3 = inlined_call_operand.vmem [shape: bf16[32,32], index: 3, kind: input, shape index: {}]
  %s4 = inlined_call_operand.vmem [shape: f32[1,32], index: 4, kind: input, shape index: {}]
  %s5 = inlined_call_operand.vmem [shape: f32[1,32], index: 5, kind: input, shape index: {}]
  %s6 = inlined_call_operand.vmem [shape: bf16[32,32], index: 6, kind: input, shape index: {}]
  %s7 = inlined_call_operand.vmem [shape: f32[1,32], index: 7, kind: input, shape index: {}]
  %s8 = inlined_call_operand.vmem [shape: f32[1,32], index: 8, kind: input, shape index: {}]
  %s9 = inlined_call_operand.vmem [shape: bf16[32,64], index: 9, kind: input, shape index: {}]
  %s10 = inlined_call_operand.vmem [shape: bf16[64,32], index: 10, kind: input, shape index: {}]
  %s11 = inlined_call_operand.vmem [shape: f32[1,32], index: 11, kind: input, shape index: {}]
  %s12 = inlined_call_operand.vmem [shape: f32[1,32], index: 12, kind: input, shape index: {}]
  %s13 = inlined_call_operand.vmem [shape: f32[2,8,32], index: 13, kind: output, shape index: {0}]
  %s14 = inlined_call_operand.vmem [shape: f32[2,8,64], index: 14, kind: output, shape index: {1}]
  %s15 = inlined_call_operand.vmem [shape: f32[2,2,8,8], index: 15, kind: output, shape index: {2}]
  %16 = xla_tuple %s13, %s14, %s15
  %s17 = sld [smem:[#allocation0]]
  $region101: #{decoder_layer_forward.1} parent=0
    _
  %s19 = ssub.s32 1, %s17
  %s20 = scalar_select 0, %s19, %s17
  loop: start=0, step=1, limit=4
  $region2: #{decoder_layer_forward.1} parent=0 // loop_pre_header
    _
  $region3: #{decoder_layer_forward.1} parent=0 // loop_header
    %s22 = sphi 0, %s26
    %p23 = scmp.ge.s32.totalorder %s22, 4
    %s32 = sphi 0, %s34
    %s35 = sphi 0, %s32
    %s36 = sphi 0, %s35
    %s52 = sphi 0, %s36
    %s56 = sphi 0, %s56
    %s58 = sphi 0, %s56
    %s59 = sphi 0, %s58
    %s73 = sphi 0, %s59
    %s77 = sphi 0, %s77
    %s79 = sphi 0, %s77
    %s80 = sphi 0, %s79
    %s94 = sphi 0, %s80
    %s98 = sphi 0, %s98
    %s100 = sphi 0, %s98
    %s101 = sphi 0, %s100
    %s115 = sphi 0, %s101
    %s119 = sphi 0, %s119
    %s121 = sphi 0, %s119
    %s122 = sphi 0, %s121
    %s136 = sphi 0, %s122
    %s140 = sphi 0, %s140
    %s142 = sphi 0, %s140
    %s143 = sphi 0, %s142
    %s157 = sphi 0, %s143
    %s161 = sphi 0, %s161
    %s163 = sphi 0, %s161
    %s164 = sphi 0, %s163
    %s178 = sphi 0, %s164
    %s182 = sphi 0, %s182
    %s184 = sphi 0, %s182
    %s185 = sphi 0, %s184
    %s199 = sphi 0, %s185
    %s203 = sphi 0, %s203
    %s205 = sphi 0, %s203
    %s206 = sphi 0, %s205
    %s220 = sphi 0, %s206
    %s224 = sphi 0, %s224
    %s226 = sphi 0, %s224
    %s227 = sphi 0, %s226
    %s241 = sphi 0, %s227
    %s245 = sphi 0, %s245
    %s247 = sphi 0, %s245
    %s248 = sphi 0, %s247
    %s262 = sphi 0, %s248
    %s266 = sphi 0, %s266
    %s268 = sphi 0, %s266
    %s269 = sphi 0, %s268
    %s283 = sphi 0, %s269
    %s287 = sphi 0, %s287
    %s289 = sphi 0, %s287
    %s290 = sphi 0, %s289
    %s304 = sphi 0, %s290
    %s310 = sphi 0, %s312
    %s313 = sphi 0, %s310
    %s314 = sphi 0, %s313
    %s330 = sphi 0, %s314
    %s336 = sphi 0, %s338
    %s339 = sphi 0, %s336
    %s340 = sphi 0, %s339
    %s356 = sphi 0, %s340
    %s362 = sphi 0, %s364
    %s365 = sphi 0, %s362
    %s366 = sphi 0, %s365
    %s382 = sphi 0, %s366
  $region4: #{decoder_layer_forward.1} parent=0 // loop_header_branch
    %25 = sbr.rel (%p23) target = $region8
  $region5: #{decoder_layer_forward.1} parent=0 // loop_body
    %s27 = ssub.s32 %s22, 1
    %s28 = ssub.s32 %s22, 2
    %s29 = sadd.s32 %s22, 1
    %s30 = ssub.s32 %s22, %s29
    %p31 = scmp.eq.s32.totalorder %s30, 0
    %s33 = sadd.s32 %s32, 1
    %s34 = scalar_select %p31, %s32, %s33
    %p37 = pneg %p31
    %p38 = scmp.eq.s32.totalorder %s22, 1
    %p39 = por %p37, %p38
    %p40 = scmp.ne.s32.totalorder %s32, %s35
    %p41 = scmp.eq.s32.totalorder %s22, 0
    %p42 = por %p40, %p41
    %p43 = scmp.ne.s32.totalorder %s32, %s35
    %p44 = scmp.eq.s32.totalorder %s27, 1
    %p45 = por %p43, %p44
    %p46 = scmp.ne.s32.totalorder %s35, %s36
    %p47 = scmp.eq.s32.totalorder %s27, 0
    %p48 = por %p46, %p47
    %p49 = scmp.ne.s32.totalorder %s35, %s36
    %p50 = scmp.eq.s32.totalorder %s28, 1
    %p51 = por %p49, %p50
    %p53 = scmp.ne.s32.totalorder %s36, %s52
    %p54 = scmp.eq.s32.totalorder %s28, 0
    %p55 = por %p53, %p54
    %s57 = sadd.s32 %s56, 1
    %p60 = scmp.eq.s32.totalorder %s22, 1
    %p61 = scmp.ne.s32.totalorder %s56, %s58
    %p62 = scmp.eq.s32.totalorder %s22, 0
    %p63 = por %p61, %p62
    %p64 = scmp.ne.s32.totalorder %s56, %s58
    %p65 = scmp.eq.s32.totalorder %s27, 1
    %p66 = por %p64, %p65
    %p67 = scmp.ne.s32.totalorder %s58, %s59
    %p68 = scmp.eq.s32.totalorder %s27, 0
    %p69 = por %p67, %p68
    %p70 = scmp.ne.s32.totalorder %s58, %s59
    %p71 = scmp.eq.s32.totalorder %s28, 1
    %p72 = por %p70, %p71
    %p74 = scmp.ne.s32.totalorder %s59, %s73
    %p75 = scmp.eq.s32.totalorder %s28, 0
    %p76 = por %p74, %p75
    %s78 = sadd.s32 %s77, 1
    %p81 = scmp.eq.s32.totalorder %s22, 1
    %p82 = scmp.ne.s32.totalorder %s77, %s79
    %p83 = scmp.eq.s32.totalorder %s22, 0
    %p84 = por %p82, %p83
    %p85 = scmp.ne.s32.totalorder %s77, %s79
    %p86 = scmp.eq.s32.totalorder %s27, 1
    %p87 = por %p85, %p86
    %p88 = scmp.ne.s32.totalorder %s79, %s80
    %p89 = scmp.eq.s32.totalorder %s27, 0
    %p90 = por %p88, %p89
    %p91 = scmp.ne.s32.totalorder %s79, %s80
    %p92 = scmp.eq.s32.totalorder %s28, 1
    %p93 = por %p91, %p92
    %p95 = scmp.ne.s32.totalorder %s80, %s94
    %p96 = scmp.eq.s32.totalorder %s28, 0
    %p97 = por %p95, %p96
    %s99 = sadd.s32 %s98, 1
    %p102 = scmp.eq.s32.totalorder %s22, 1
    %p103 = scmp.ne.s32.totalorder %s98, %s100
    %p104 = scmp.eq.s32.totalorder %s22, 0
    %p105 = por %p103, %p104
    %p106 = scmp.ne.s32.totalorder %s98, %s100
    %p107 = scmp.eq.s32.totalorder %s27, 1
    %p108 = por %p106, %p107
    %p109 = scmp.ne.s32.totalorder %s100, %s101
    %p110 = scmp.eq.s32.totalorder %s27, 0
    %p111 = por %p109, %p110
    %p112 = scmp.ne.s32.totalorder %s100, %s101
    %p113 = scmp.eq.s32.totalorder %s28, 1
    %p114 = por %p112, %p113
    %p116 = scmp.ne.s32.totalorder %s101, %s115
    %p117 = scmp.eq.s32.totalorder %s28, 0
    %p118 = por %p116, %p117
    %s120 = sadd.s32 %s119, 1
    %p123 = scmp.eq.s32.totalorder %s22, 1
    %p124 = scmp.ne.s32.totalorder %s119, %s121
    %p125 = scmp.eq.s32.totalorder %s22, 0
    %p126 = por %p124, %p125
    %p127 = scmp.ne.s32.totalorder %s119, %s121
    %p128 = scmp.eq.s32.totalorder %s27, 1
    %p129 = por %p127, %p128
    %p130 = scmp.ne.s32.totalorder %s121, %s122
    %p131 = scmp.eq.s32.totalorder %s27, 0
    %p132 = por %p130, %p131
    %p133 = scmp.ne.s32.totalorder %s121, %s122
    %p134 = scmp.eq.s32.totalorder %s28, 1
    %p135 = por %p133, %p134
    %p137 = scmp.ne.s32.totalorder %s122, %s136
    %p138 = scmp.eq.s32.totalorder %s28, 0
    %p139 = por %p137, %p138
    %s141 = sadd.s32 %s140, 1
    %p144 = scmp.eq.s32.totalorder %s22, 1
    %p145 = scmp.ne.s32.totalorder %s140, %s142
    %p146 = scmp.eq.s32.totalorder %s22, 0
    %p147 = por %p145, %p146
    %p148 = scmp.ne.s32.totalorder %s140, %s142
    %p149 = scmp.eq.s32.totalorder %s27, 1
    %p150 = por %p148, %p149
    %p151 = scmp.ne.s32.totalorder %s142, %s143
    %p152 = scmp.eq.s32.totalorder %s27, 0
    %p153 = por %p151, %p152
    %p154 = scmp.ne.s32.totalorder %s142, %s143
    %p155 = scmp.eq.s32.totalorder %s28, 1
    %p156 = por %p154, %p155
    %p158 = scmp.ne.s32.totalorder %s143, %s157
    %p159 = scmp.eq.s32.totalorder %s28, 0
    %p160 = por %p158, %p159
    %s162 = sadd.s32 %s161, 1
    %p165 = scmp.eq.s32.totalorder %s22, 1
    %p166 = scmp.ne.s32.totalorder %s161, %s163
    %p167 = scmp.eq.s32.totalorder %s22, 0
    %p168 = por %p166, %p167
    %p169 = scmp.ne.s32.totalorder %s161, %s163
    %p170 = scmp.eq.s32.totalorder %s27, 1
    %p171 = por %p169, %p170
    %p172 = scmp.ne.s32.totalorder %s163, %s164
    %p173 = scmp.eq.s32.totalorder %s27, 0
    %p174 = por %p172, %p173
    %p175 = scmp.ne.s32.totalorder %s163, %s164
    %p176 = scmp.eq.s32.totalorder %s28, 1
    %p177 = por %p175, %p176
    %p179 = scmp.ne.s32.totalorder %s164, %s178
    %p180 = scmp.eq.s32.totalorder %s28, 0
    %p181 = por %p179, %p180
    %s183 = sadd.s32 %s182, 1
    %p186 = scmp.eq.s32.totalorder %s22, 1
    %p187 = scmp.ne.s32.totalorder %s182, %s184
    %p188 = scmp.eq.s32.totalorder %s22, 0
    %p189 = por %p187, %p188
    %p190 = scmp.ne.s32.totalorder %s182, %s184
    %p191 = scmp.eq.s32.totalorder %s27, 1
    %p192 = por %p190, %p191
    %p193 = scmp.ne.s32.totalorder %s184, %s185
    %p194 = scmp.eq.s32.totalorder %s27, 0
    %p195 = por %p193, %p194
    %p196 = scmp.ne.s32.totalorder %s184, %s185
    %p197 = scmp.eq.s32.totalorder %s28, 1
    %p198 = por %p196, %p197
    %p200 = scmp.ne.s32.totalorder %s185, %s199
    %p201 = scmp.eq.s32.totalorder %s28, 0
    %p202 = por %p200, %p201
    %s204 = sadd.s32 %s203, 1
    %p207 = scmp.eq.s32.totalorder %s22, 1
    %p208 = scmp.ne.s32.totalorder %s203, %s205
    %p209 = scmp.eq.s32.totalorder %s22, 0
    %p210 = por %p208, %p209
    %p211 = scmp.ne.s32.totalorder %s203, %s205
    %p212 = scmp.eq.s32.totalorder %s27, 1
    %p213 = por %p211, %p212
    %p214 = scmp.ne.s32.totalorder %s205, %s206
    %p215 = scmp.eq.s32.totalorder %s27, 0
    %p216 = por %p214, %p215
    %p217 = scmp.ne.s32.totalorder %s205, %s206
    %p218 = scmp.eq.s32.totalorder %s28, 1
    %p219 = por %p217, %p218
    %p221 = scmp.ne.s32.totalorder %s206, %s220
    %p222 = scmp.eq.s32.totalorder %s28, 0
    %p223 = por %p221, %p222
    %s225 = sadd.s32 %s224, 1
    %p228 = scmp.eq.s32.totalorder %s22, 1
    %p229 = scmp.ne.s32.totalorder %s224, %s226
    %p230 = scmp.eq.s32.totalorder %s22, 0
    %p231 = por %p229, %p230
    %p232 = scmp.ne.s32.totalorder %s224, %s226
    %p233 = scmp.eq.s32.totalorder %s27, 1
    %p234 = por %p232, %p233
    %p235 = scmp.ne.s32.totalorder %s226, %s227
    %p236 = scmp.eq.s32.totalorder %s27, 0
    %p237 = por %p235, %p236
    %p238 = scmp.ne.s32.totalorder %s226, %s227
    %p239 = scmp.eq.s32.totalorder %s28, 1
    %p240 = por %p238, %p239
    %p242 = scmp.ne.s32.totalorder %s227, %s241
    %p243 = scmp.eq.s32.totalorder %s28, 0
    %p244 = por %p242, %p243
    %s246 = sadd.s32 %s245, 1
    %p249 = scmp.eq.s32.totalorder %s22, 1
    %p250 = scmp.ne.s32.totalorder %s245, %s247
    %p251 = scmp.eq.s32.totalorder %s22, 0
    %p252 = por %p250, %p251
    %p253 = scmp.ne.s32.totalorder %s245, %s247
    %p254 = scmp.eq.s32.totalorder %s27, 1
    %p255 = por %p253, %p254
    %p256 = scmp.ne.s32.totalorder %s247, %s248
    %p257 = scmp.eq.s32.totalorder %s27, 0
    %p258 = por %p256, %p257
    %p259 = scmp.ne.s32.totalorder %s247, %s248
    %p260 = scmp.eq.s32.totalorder %s28, 1
    %p261 = por %p259, %p260
    %p263 = scmp.ne.s32.totalorder %s248, %s262
    %p264 = scmp.eq.s32.totalorder %s28, 0
    %p265 = por %p263, %p264
    %s267 = sadd.s32 %s266, 1
    %p270 = scmp.eq.s32.totalorder %s22, 1
    %p271 = scmp.ne.s32.totalorder %s266, %s268
    %p272 = scmp.eq.s32.totalorder %s22, 0
    %p273 = por %p271, %p272
    %p274 = scmp.ne.s32.totalorder %s266, %s268
    %p275 = scmp.eq.s32.totalorder %s27, 1
    %p276 = por %p274, %p275
    %p277 = scmp.ne.s32.totalorder %s268, %s269
    %p278 = scmp.eq.s32.totalorder %s27, 0
    %p279 = por %p277, %p278
    %p280 = scmp.ne.s32.totalorder %s268, %s269
    %p281 = scmp.eq.s32.totalorder %s28, 1
    %p282 = por %p280, %p281
    %p284 = scmp.ne.s32.totalorder %s269, %s283
    %p285 = scmp.eq.s32.totalorder %s28, 0
    %p286 = por %p284, %p285
    %s288 = sadd.s32 %s287, 1
    %p291 = scmp.eq.s32.totalorder %s22, 1
    %p292 = scmp.ne.s32.totalorder %s287, %s289
    %p293 = scmp.eq.s32.totalorder %s22, 0
    %p294 = por %p292, %p293
    %p295 = scmp.ne.s32.totalorder %s287, %s289
    %p296 = scmp.eq.s32.totalorder %s27, 1
    %p297 = por %p295, %p296
    %p298 = scmp.ne.s32.totalorder %s289, %s290
    %p299 = scmp.eq.s32.totalorder %s27, 0
    %p300 = por %p298, %p299
    %p301 = scmp.ne.s32.totalorder %s289, %s290
    %p302 = scmp.eq.s32.totalorder %s28, 1
    %p303 = por %p301, %p302
    %p305 = scmp.ne.s32.totalorder %s290, %s304
    %p306 = scmp.eq.s32.totalorder %s28, 0
    %p307 = por %p305, %p306
    %s308 = ssub.s32 %s22, %s29
    %p309 = scmp.eq.s32.totalorder %s308, 0
    %s311 = sadd.s32 %s310, 1
    %s312 = scalar_select %p309, %s310, %s311
    %p315 = pneg %p309
    %p316 = scmp.eq.s32.totalorder %s22, 1
    %p317 = por %p315, %p316
    %p318 = scmp.ne.s32.totalorder %s310, %s313
    %p319 = scmp.eq.s32.totalorder %s22, 0
    %p320 = por %p318, %p319
    %p321 = scmp.ne.s32.totalorder %s310, %s313
    %p322 = scmp.eq.s32.totalorder %s27, 1
    %p323 = por %p321, %p322
    %p324 = scmp.ne.s32.totalorder %s313, %s314
    %p325 = scmp.eq.s32.totalorder %s27, 0
    %p326 = por %p324, %p325
    %p327 = scmp.ne.s32.totalorder %s313, %s314
    %p328 = scmp.eq.s32.totalorder %s28, 1
    %p329 = por %p327, %p328
    %p331 = scmp.ne.s32.totalorder %s314, %s330
    %p332 = scmp.eq.s32.totalorder %s28, 0
    %p333 = por %p331, %p332
    %s334 = ssub.s32 %s22, %s29
    %p335 = scmp.eq.s32.totalorder %s334, 0
    %s337 = sadd.s32 %s336, 1
    %s338 = scalar_select %p335, %s336, %s337
    %p341 = pneg %p335
    %p342 = scmp.eq.s32.totalorder %s22, 1
    %p343 = por %p341, %p342
    %p344 = scmp.ne.s32.totalorder %s336, %s339
    %p345 = scmp.eq.s32.totalorder %s22, 0
    %p346 = por %p344, %p345
    %p347 = scmp.ne.s32.totalorder %s336, %s339
    %p348 = scmp.eq.s32.totalorder %s27, 1
    %p349 = por %p347, %p348
    %p350 = scmp.ne.s32.totalorder %s339, %s340
    %p351 = scmp.eq.s32.totalorder %s27, 0
    %p352 = por %p350, %p351
    %p353 = scmp.ne.s32.totalorder %s339, %s340
    %p354 = scmp.eq.s32.totalorder %s28, 1
    %p355 = por %p353, %p354
    %p357 = scmp.ne.s32.totalorder %s340, %s356
    %p358 = scmp.eq.s32.totalorder %s28, 0
    %p359 = por %p357, %p358
    %s360 = ssub.s32 %s22, %s29
    %p361 = scmp.eq.s32.totalorder %s360, 0
    %s363 = sadd.s32 %s362, 1
    %s364 = scalar_select %p361, %s362, %s363
    %p367 = pneg %p361
    %p368 = scmp.eq.s32.totalorder %s22, 1
    %p369 = por %p367, %p368
    %p370 = scmp.ne.s32.totalorder %s362, %s365
    %p371 = scmp.eq.s32.totalorder %s22, 0
    %p372 = por %p370, %p371
    %p373 = scmp.ne.s32.totalorder %s362, %s365
    %p374 = scmp.eq.s32.totalorder %s27, 1
    %p375 = por %p373, %p374
    %p376 = scmp.ne.s32.totalorder %s365, %s366
    %p377 = scmp.eq.s32.totalorder %s27, 0
    %p378 = por %p376, %p377
    %p379 = scmp.ne.s32.totalorder %s365, %s366
    %p380 = scmp.eq.s32.totalorder %s28, 1
    %p381 = por %p379, %p380
    %p383 = scmp.ne.s32.totalorder %s366, %s382
    %p384 = scmp.eq.s32.totalorder %s28, 0
    %p385 = por %p383, %p384
    %p386 = scmp.le.s32.totalorder 1, %s22
    %p387 = scmp.lt.s32.totalorder %s22, 3
    %p388 = pnand %p386, %p387
    %p389 = pneg %p388
    // Predicated region
    $region9: #{decoder_layer_forward.1} parent=5 // pred_check
      _
    $region10: #{decoder_layer_forward.1} parent=5 // pred_check_branch
      %391 = sbr.rel (%p388) target = $region12
    $region11: #{decoder_layer_forward.1} parent=5 // pred_region
      %s392 = ssub.s32 %s22, 1
      // Predicated region
      $region13: #{decoder_layer_forward.1} parent=11 // pred_check
        %p393 = pneg %p69
      $region14: #{decoder_layer_forward.1} parent=11 // pred_check_branch
        %395 = sbr.rel (%p393) target = $region16
      $region15: #{decoder_layer_forward.1} parent=11 // pred_region
        _
      $region16: #{decoder_layer_forward.1} parent=11 // pred_fallthru
        _
      // Predicated region
      $region17: #{decoder_layer_forward.1} parent=11 // pred_check
        %p396 = pneg %p90
      $region18: #{decoder_layer_forward.1} parent=11 // pred_check_branch
        %398 = sbr.rel (%p396) target = $region20
      $region19: #{decoder_layer_forward.1} parent=11 // pred_region
        _
      $region20: #{decoder_layer_forward.1} parent=11 // pred_fallthru
        _
      // Predicated region
      $region21: #{decoder_layer_forward.1} parent=11 // pred_check
        %p399 = pneg %p111
      $region22: #{decoder_layer_forward.1} parent=11 // pred_check_branch
        %401 = sbr.rel (%p399) target = $region24
      $region23: #{decoder_layer_forward.1} parent=11 // pred_region
        _
      $region24: #{decoder_layer_forward.1} parent=11 // pred_fallthru
        _
      // Predicated region
      $region25: #{decoder_layer_forward.1} parent=11 // pred_check
        %p402 = pneg %p132
      $region26: #{decoder_layer_forward.1} parent=11 // pred_check_branch
        %404 = sbr.rel (%p402) target = $region28
      $region27: #{decoder_layer_forward.1} parent=11 // pred_region
        _
      $region28: #{decoder_layer_forward.1} parent=11 // pred_fallthru
        _
      // Predicated region
      $region29: #{decoder_layer_forward.1} parent=11 // pred_check
        %p405 = pneg %p153
      $region30: #{decoder_layer_forward.1} parent=11 // pred_check_branch
        %407 = sbr.rel (%p405) target = $region32
      $region31: #{decoder_layer_forward.1} parent=11 // pred_region
        _
      $region32: #{decoder_layer_forward.1} parent=11 // pred_fallthru
        _
      // Predicated region
      $region33: #{decoder_layer_forward.1} parent=11 // pred_check
        %p408 = pneg %p174
      $region34: #{decoder_layer_forward.1} parent=11 // pred_check_branch
        %410 = sbr.rel (%p408) target = $region36
      $region35: #{decoder_layer_forward.1} parent=11 // pred_region
        _
      $region36: #{decoder_layer_forward.1} parent=11 // pred_fallthru
        _
      // Predicated region
      $region37: #{decoder_layer_forward.1} parent=11 // pred_check
        %p411 = pneg %p195
      $region38: #{decoder_layer_forward.1} parent=11 // pred_check_branch
        %413 = sbr.rel (%p411) target = $region40
      $region39: #{decoder_layer_forward.1} parent=11 // pred_region
        _
      $region40: #{decoder_layer_forward.1} parent=11 // pred_fallthru
        _
      // Predicated region
      $region41: #{decoder_layer_forward.1} parent=11 // pred_check
        %p414 = pneg %p216
      $region42: #{decoder_layer_forward.1} parent=11 // pred_check_branch
        %416 = sbr.rel (%p414) target = $region44
      $region43: #{decoder_layer_forward.1} parent=11 // pred_region
        _
      $region44: #{decoder_layer_forward.1} parent=11 // pred_fallthru
        _
      // Predicated region
      $region45: #{decoder_layer_forward.1} parent=11 // pred_check
        %p417 = pneg %p237
      $region46: #{decoder_layer_forward.1} parent=11 // pred_check_branch
        %419 = sbr.rel (%p417) target = $region48
      $region47: #{decoder_layer_forward.1} parent=11 // pred_region
        _
      $region48: #{decoder_layer_forward.1} parent=11 // pred_fallthru
        _
      // Predicated region
      $region49: #{decoder_layer_forward.1} parent=11 // pred_check
        %p420 = pneg %p258
      $region50: #{decoder_layer_forward.1} parent=11 // pred_check_branch
        %422 = sbr.rel (%p420) target = $region52
      $region51: #{decoder_layer_forward.1} parent=11 // pred_region
        _
      $region52: #{decoder_layer_forward.1} parent=11 // pred_fallthru
        _
      // Predicated region
      $region53: #{decoder_layer_forward.1} parent=11 // pred_check
        %p423 = pneg %p279
      $region54: #{decoder_layer_forward.1} parent=11 // pred_check_branch
        %425 = sbr.rel (%p423) target = $region56
      $region55: #{decoder_layer_forward.1} parent=11 // pred_region
        _
      $region56: #{decoder_layer_forward.1} parent=11 // pred_fallthru
        _
      // Predicated region
      $region57: #{decoder_layer_forward.1} parent=11 // pred_check
        %p426 = pneg %p300
      $region58: #{decoder_layer_forward.1} parent=11 // pred_check_branch
        %428 = sbr.rel (%p426) target = $region60
      $region59: #{decoder_layer_forward.1} parent=11 // pred_region
        _
      $region60: #{decoder_layer_forward.1} parent=11 // pred_fallthru
        _
    $region12: #{decoder_layer_forward.1} parent=5 // pred_fallthru
      _
    %p429 = scmp.lt.s32.totalorder %s22, 2
    // Predicated region
    $region61: #{decoder_layer_forward.1} parent=5 // pred_check
      %p430 = pneg %p429
    $region62: #{decoder_layer_forward.1} parent=5 // pred_check_branch
      %432 = sbr.rel (%p430) target = $region64
    $region63: #{decoder_layer_forward.1} parent=5 // pred_region
      // Predicated region
      $region65: #{decoder_layer_forward.1} parent=63 // pred_check
        %p433 = pneg %p42
      $region66: #{decoder_layer_forward.1} parent=63 // pred_check_branch
        %435 = sbr.rel (%p433) target = $region68
      $region67: #{decoder_layer_forward.1} parent=63 // pred_region
        %p436 = scmp.lt.s32.totalorder %s22, 1
        %s437 = scalar_select %p436, %s22, 1
        %s438 = smul.addr %s437, 8
        %s439 = scalar_lea.vmem %s0, %s438
      $region68: #{decoder_layer_forward.1} parent=63 // pred_fallthru
        _
    $region64: #{decoder_layer_forward.1} parent=5 // pred_fallthru
      _
    %p440 = scmp.le.s32.totalorder 1, %s22
    %p441 = scmp.lt.s32.totalorder %s22, 3
    %p442 = pnand %p440, %p441
    %p443 = pneg %p442
    // Predicated region
    $region69: #{decoder_layer_forward.1} parent=5 // pred_check
      _
    $region70: #{decoder_layer_forward.1} parent=5 // pred_check_branch
      %445 = sbr.rel (%p442) target = $region72
    $region71: #{decoder_layer_forward.1} parent=5 // pred_region
      %s446 = ssub.s32 %s22, 1
      %p447 = scmp.lt.s32.totalorder %s27, 1
      %s448 = scalar_select %p447, %s27, 1
      %s449 = smul.addr %s448, 8
      %s450 = scalar_lea.vmem %s0, %s449
      %p451 = pneg %p48
      %p452 = pneg %p45
      %p453 = pneg %p69
      %p454 = pneg %p66
      %p455 = pneg %p90
      %p456 = pneg %p87
      %p457 = pneg %p111
      %p458 = pneg %p108
      %p459 = pneg %p132
      %p460 = pneg %p129
      %p461 = pneg %p153
      %p462 = pneg %p150
      %p463 = pneg %p174
      %p464 = pneg %p171
      %p465 = pneg %p195
      %p466 = pneg %p192
      %p467 = pneg %p216
      %p468 = pneg %p213
      %p469 = pneg %p237
      %p470 = pneg %p234
      %p471 = pneg %p258
      %p472 = pneg %p255
      %p473 = pneg %p279
      %p474 = pneg %p276
      %p475 = pneg %p300
      %p476 = pneg %p297
      %p477 = pneg %p326
      %p478 = pneg %p323
      %p479 = scmp.lt.s32.totalorder %s27, 1
      %s480 = scalar_select %p479, %s27, 1
      %s481 = smul.addr %s480, 8
      %s482 = scalar_lea.vmem %s13, %s481
      %p483 = pneg %p352
      %p484 = pneg %p349
      %p485 = scmp.lt.s32.totalorder %s27, 1
      %s486 = scalar_select %p485, %s27, 1
      %s487 = smul.addr %s486, 8
      %s488 = scalar_lea.vmem %s14, %s487
      %p489 = pneg %p378
      %p490 = pneg %p375
      %p491 = scmp.lt.s32.totalorder %s27, 1
      %s492 = scalar_select %p491, %s27, 1
      %s493 = smul.addr %s492, 2
      %s494 = smul.addr %s493, 8
      %s495 = scalar_lea.vmem %s15, %s494
      %p496 = scmp.lt.s32.totalorder %s27, 1
      %s497 = scalar_select %p496, %s27, 1
      %s498 = smul.addr %s497, 8
      %s499 = scalar_lea.vmem %s0, %s498
      %p500 = scmp.lt.s32.totalorder %s27, 1
      %s501 = scalar_select %p500, %s27, 1
      %s502 = smul.addr %s501, 8
      %s503 = scalar_lea.vmem %s13, %s502
      %p504 = scmp.lt.s32.totalorder %s27, 1
      %s505 = scalar_select %p504, %s27, 1
      %s506 = smul.addr %s505, 8
      %s507 = scalar_lea.vmem %s14, %s506
      %p508 = scmp.lt.s32.totalorder %s27, 1
      %s509 = scalar_select %p508, %s27, 1
      %s510 = smul.addr %s509, 2
      %s511 = smul.addr %s510, 8
      %s512 = scalar_lea.vmem %s15, %s511
      %v514 = vld [vmem:[%s499] sm:$0xff]
      %v515 = vpack.c.bf16 %v514, %v514
      %v516 = vld [vmem:[%s2] sm:$0xf]
      %v517 = vld [vmem:[%s2 + $0x4] sm:$0xf]
      %v518 = vld [vmem:[%s2 + $0x8] sm:$0xf]
      %v519 = vld [vmem:[%s2 + $0xc] sm:$0xf]
      %v524 = vunpack.c.l.b16 %v516
      %v525 = vunpack.c.l.b16 %v517
      %v526 = vunpack.c.l.b16 %v518
      %v527 = vunpack.c.l.b16 %v519
      %v528 = vpack.c.b16 %v525, %v524
      %v529 = vpack.c.b16 %v527, %v526
      %vm532 = vcmask 261120
      %v534 = vsel %vm532, %v515, 0
      %536 = vmatprep.subr.bf16.mxu0 0
      %537 = vmatpush1.bf16.msra.mxu0 %v528
      %538 = vmatprep.subr.bf16.mxu0 0
      %539 = vmatpush1.bf16.msra.mxu0 %v529
      %540 = vmatprep.subr.bf16.mxu0 0
      %541 = vmatpush1.bf16.msra.mxu0 0
      %542 = vmatprep.subr.bf16.mxu0 0
      %543 = vmatpush1.bf16.msra.mxu0 0
      %544 = vmatprep.subr.bf16.mxu0 0
      %545 = vmatpush1.bf16.msra.mxu0 0
      %546 = vmatprep.subr.bf16.mxu0 0
      %547 = vmatpush1.bf16.msra.mxu0 0
      %548 = vmatprep.subr.bf16.mxu0 0
      %549 = vmatpush1.bf16.msra.mxu0 0
      %550 = vmatprep.subr.bf16.mxu0 0
      %551 = vmatpush1.bf16.msra.mxu0 0
      %552 = vmatprep.subr.bf16.mxu0 0
      %553 = vmatpush1.bf16.msra.mxu0 0
      %554 = vmatprep.subr.bf16.mxu0 0
      %555 = vmatpush1.bf16.msra.mxu0 0
      %556 = vmatprep.subr.bf16.mxu0 0
      %557 = vmatpush1.bf16.msra.mxu0 0
      %558 = vmatprep.subr.bf16.mxu0 0
      %559 = vmatpush1.bf16.msra.mxu0 0
      %560 = vmatprep.subr.bf16.mxu0 0
      %561 = vmatpush1.bf16.msra.mxu0 0
      %562 = vmatprep.subr.bf16.mxu0 0
      %563 = vmatpush1.bf16.msra.mxu0 0
      %564 = vmatprep.subr.bf16.mxu0 0
      %565 = vmatpush1.bf16.msra.mxu0 0
      %566 = vmatprep.subr.bf16.mxu0 0
      %567 = vmatpush1.bf16.msra.mxu0 0
      %568 = vmatprep.mubr.bf16.mxu0 0
      %569 = vmatmul.mubr.bf16.gmra.mrb[0].mxu0 %v534
      %v570 = vpop.f32.mrb[0].mxu0
      %v571 = vadd.f32 0.0, %v570
      %v572 = vpop.f32.mrb[0].mxu0
      %v573 = vpop.f32.mrb[0].mxu0
      %v574 = vpop.f32.mrb[0].mxu0
      %575 = vdwg.mxu0
      %v576 = vld [vmem:[%s1] sm:$0xf]
      %v577 = vld [vmem:[%s3] sm:$0xf]
      %v578 = vld [vmem:[%s3 + $0x4] sm:$0xf]
      %v579 = vld [vmem:[%s3 + $0x8] sm:$0xf]
      %v580 = vld [vmem:[%s3 + $0xc] sm:$0xf]
      %v585 = vunpack.c.l.b16 %v577
      %v586 = vunpack.c.l.b16 %v578
      %v587 = vunpack.c.l.b16 %v579
      %v588 = vunpack.c.l.b16 %v580
      %v589 = vpack.c.b16 %v586, %v585
      %v590 = vpack.c.b16 %v588, %v587
      %v594 = vsel %vm532, %v576, 0
      %596 = vmatprep.subr.bf16.mxu0 0
      %597 = vmatpush1.bf16.msra.mxu0 %v589
      %598 = vmatprep.subr.bf16.mxu0 0
      %599 = vmatpush1.bf16.msra.mxu0 %v590
      %600 = vmatprep.subr.bf16.mxu0 0
      %601 = vmatpush1.bf16.msra.mxu0 0
      %602 = vmatprep.subr.bf16.mxu0 0
      %603 = vmatpush1.bf16.msra.mxu0 0
      %604 = vmatprep.subr.bf16.mxu0 0
      %605 = vmatpush1.bf16.msra.mxu0 0
      %606 = vmatprep.subr.bf16.mxu0 0
      %607 = vmatpush1.bf16.msra.mxu0 0
      %608 = vmatprep.subr.bf16.mxu0 0
      %609 = vmatpush1.bf16.msra.mxu0 0
      %610 = vmatprep.subr.bf16.mxu0 0
      %611 = vmatpush1.bf16.msra.mxu0 0
      %612 = vmatprep.subr.bf16.mxu0 0
      %613 = vmatpush1.bf16.msra.mxu0 0
      %614 = vmatprep.subr.bf16.mxu0 0
      %615 = vmatpush1.bf16.msra.mxu0 0
      %616 = vmatprep.subr.bf16.mxu0 0
      %617 = vmatpush1.bf16.msra.mxu0 0
      %618 = vmatprep.subr.bf16.mxu0 0
      %619 = vmatpush1.bf16.msra.mxu0 0
      %620 = vmatprep.subr.bf16.mxu0 0
      %621 = vmatpush1.bf16.msra.mxu0 0
      %622 = vmatprep.subr.bf16.mxu0 0
      %623 = vmatpush1.bf16.msra.mxu0 0
      %624 = vmatprep.subr.bf16.mxu0 0
      %625 = vmatpush1.bf16.msra.mxu0 0
      %626 = vmatprep.subr.bf16.mxu0 0
      %627 = vmatpush1.bf16.msra.mxu0 0
      %628 = vmatprep.mubr.bf16.mxu0 0
      %629 = vmatmul.mubr.bf16.gmra.mrb[0].mxu0 %v594
      %v630 = vpop.f32.mrb[0].mxu0
      %v631 = vadd.f32 0.0, %v630
      %v632 = vpop.f32.mrb[0].mxu0
      %v633 = vpop.f32.mrb[0].mxu0
      %v634 = vpop.f32.mrb[0].mxu0
      %635 = vdwg.mxu0
      %v636 = vld [vmem:[%s4] sm:$0x1]
      %v638 = vlaneseq
      %v639 = vshrl.u32 %v638, 7
      %v640 = vsub.s32 0, %v639
      %v641 = vrot.slane %v636, %v640
      %v643 = vadd.f32 %v571, %v641
      %v644 = vmul.f32 %v643, 0.25
      %v645 = vpack.c.bf16 %v644, %v644
      %v646 = vld [vmem:[%s5] sm:$0x1]
      %v648 = vlaneseq
      %v649 = vshrl.u32 %v648, 7
      %v650 = vsub.s32 0, %v649
      %v651 = vrot.slane %v646, %v650
      %v653 = vadd.f32 %v571, %v651
      %v654 = vmul.f32 %v653, 0.25
      %v655 = vpack.c.bf16 %v654, %v654
      %v657 = vrot.slane %v655, 4
      %vm658 = vcmask 1043456
      %v661 = vsel %vm658, %v645, %v657
      %663 = vrot.lane.b32.xlu0 %v631, 32
      %v664 = vpop.permute.xlu0 %663
      %v666 = vpack.c.bf16 %v664, %v571
      %668 = vrot.lane.b32.xlu0 %v666, 96
      %v669 = vpop.permute.xlu0 %668
      %vm670 = vcmask 130048
      %v671 = vsel %vm670, %v661, 0
      %v674 = vsel %vm670, %v669, 0
      %676 = vmatprep.subr.bf16.mxu0 0
      %677 = vmatpush1.bf16.xpose.msra.mxu0 %v674
      %678 = vmatprep.subr.bf16.mxu0 0
      %679 = vmatpush1.bf16.xpose.msra.mxu0 0
      %680 = vmatprep.subr.bf16.mxu0 0
      %681 = vmatpush1.bf16.xpose.msra.mxu0 0
      %682 = vmatprep.subr.bf16.mxu0 0
      %683 = vmatpush1.bf16.xpose.msra.mxu0 0
      %684 = vmatprep.subr.bf16.mxu0 0
      %685 = vmatpush1.bf16.xpose.msra.mxu0 0
      %686 = vmatprep.subr.bf16.mxu0 0
      %687 = vmatpush1.bf16.xpose.msra.mxu0 0
      %688 = vmatprep.subr.bf16.mxu0 0
      %689 = vmatpush1.bf16.xpose.msra.mxu0 0
      %690 = vmatprep.subr.bf16.mxu0 0
      %691 = vmatpush1.bf16.xpose.msra.mxu0 0
      %692 = vmatprep.subr.bf16.mxu0 0
      %693 = vmatpush1.bf16.xpose.msra.mxu0 0
      %694 = vmatprep.subr.bf16.mxu0 0
      %695 = vmatpush1.bf16.xpose.msra.mxu0 0
      %696 = vmatprep.subr.bf16.mxu0 0
      %697 = vmatpush1.bf16.xpose.msra.mxu0 0
      %698 = vmatprep.subr.bf16.mxu0 0
      %699 = vmatpush1.bf16.xpose.msra.mxu0 0
      %700 = vmatprep.subr.bf16.mxu0 0
      %701 = vmatpush1.bf16.xpose.msra.mxu0 0
      %702 = vmatprep.subr.bf16.mxu0 0
      %703 = vmatpush1.bf16.xpose.msra.mxu0 0
      %704 = vmatprep.subr.bf16.mxu0 0
      %705 = vmatpush1.bf16.xpose.msra.mxu0 0
      %706 = vmatprep.subr.bf16.mxu0 0
      %707 = vmatpush1.bf16.xpose.msra.mxu0 0
      %708 = vmatprep.mubr.bf16.mxu0 0
      %709 = vmatmul.mubr.bf16.gmra.mrb[0].mxu0 %v671
      %v710 = vpop.f32.mrb[0].mxu0
      %v711 = vadd.f32 0.0, %v710
      %v712 = vpop.f32.mrb[0].mxu0
      %v713 = vpop.f32.mrb[0].mxu0
      %v714 = vadd.f32 0.0, %v713
      %v715 = vpop.f32.mrb[0].mxu0
      %716 = vdwg.mxu0
      %718 = vrot.lane.b32.xlu0 %v714, 113
      %v719 = vpop.permute.xlu0 %718
      %v721 = vrot.slane %v714, 1
      %722 = vrot.lane.b32.xlu0 %v721, 122
      %v723 = vpop.permute.xlu0 %722
      %vm725 = vcmask 7168
      %v726 = vsel %vm725, %v719, 0.0
      %vm727 = vcmask 15360
      %v728 = vsel %vm727, %v726, %v723
      %729 = vrot.lane.b32.xlu0 %v714, 114
      %v730 = vpop.permute.xlu0 %729
      %732 = vrot.lane.b32.xlu0 %v721, 123
      %v733 = vpop.permute.xlu0 %732
      %v735 = vsel %vm727, %v730, 0.0
      %vm736 = vcmask 23552
      %v737 = vsel %vm736, %v735, %v733
      %738 = vrot.lane.b32.xlu0 %v714, 115
      %v739 = vpop.permute.xlu0 %738
      %741 = vrot.lane.b32.xlu0 %v721, 124
      %v742 = vpop.permute.xlu0 %741
      %v744 = vsel %vm736, %v739, 0.0
      %vm745 = vcmask 31744
      %v746 = vsel %vm745, %v744, %v742
      %747 = vrot.lane.b32.xlu0 %v714, 116
      %v748 = vpop.permute.xlu0 %747
      %750 = vrot.lane.b32.xlu0 %v721, 125
      %v751 = vpop.permute.xlu0 %750
      %v753 = vsel %vm745, %v748, 0.0
      %vm754 = vcmask 39936
      %v755 = vsel %vm754, %v753, %v751
      %756 = vrot.lane.b32.xlu0 %v714, 117
      %v757 = vpop.permute.xlu0 %756
      %759 = vrot.lane.b32.xlu0 %v721, 126
      %v760 = vpop.permute.xlu0 %759
      %v762 = vsel %vm754, %v757, 0.0
      %vm763 = vcmask 48128
      %v764 = vsel %vm763, %v762, %v760
      %765 = vrot.lane.b32.xlu0 %v714, 118
      %v766 = vpop.permute.xlu0 %765
      %768 = vrot.lane.b32.xlu0 %v721, 127
      %v769 = vpop.permute.xlu0 %768
      %v771 = vsel %vm763, %v766, 0.0
      %vm772 = vcmask 56320
      %v773 = vsel %vm772, %v771, %v769
      %774 = vrot.lane.b32.xlu0 %v714, 119
      %v775 = vpop.permute.xlu0 %774
      %v777 = vsel %vm772, %v775, 0.0
      %778 = vrot.lane.b32.xlu0 %v714, 120
      %v779 = vpop.permute.xlu0 %778
      %vm781 = vcmask 1040384
      %v782 = vsel %vm781, %v728, %v737
      %vm783 = vcmask 1041408
      %v784 = vsel %vm783, %v782, %v746
      %vm785 = vcmask 1042432
      %v786 = vsel %vm785, %v784, %v755
      %v787 = vsel %vm658, %v786, %v764
      %vm788 = vcmask 1044480
      %v789 = vsel %vm788, %v787, %v773
      %vm790 = vcmask 1045504
      %v791 = vsel %vm790, %v789, %v777
      %vm792 = vcmask 1046528
      %v793 = vsel %vm792, %v791, %v779
      %v794 = vadd.f32 %v711, %v793
      %vm795 = vcmask 64512
      %796 = vst.msk [vmem:[%s512] sm:$0xff] %vm795, %v794
      %v797 = vpack.c.bf16 %v794, %v794
      %v798 = vpack.c.bf16 %v571, %v571
      %800 = vrot.lane.b32.xlu0 %v798, 64
      %v801 = vpop.permute.xlu0 %800
      %v803 = vsel %vm795, %v797, 0
      %v806 = vsel %vm658, %v801, 0
      %808 = vmatprep.subr.bf16.mxu0 0
      %809 = vmatpush1.bf16.msra.mxu0 %v806
      %810 = vmatprep.subr.bf16.mxu0 0
      %811 = vmatpush1.bf16.msra.mxu0 0
      %812 = vmatprep.subr.bf16.mxu0 0
      %813 = vmatpush1.bf16.msra.mxu0 0
      %814 = vmatprep.subr.bf16.mxu0 0
      %815 = vmatpush1.bf16.msra.mxu0 0
      %816 = vmatprep.subr.bf16.mxu0 0
      %817 = vmatpush1.bf16.msra.mxu0 0
      %818 = vmatprep.subr.bf16.mxu0 0
      %819 = vmatpush1.bf16.msra.mxu0 0
      %820 = vmatprep.subr.bf16.mxu0 0
      %821 = vmatpush1.bf16.msra.mxu0 0
      %822 = vmatprep.subr.bf16.mxu0 0
      %823 = vmatpush1.bf16.msra.mxu0 0
      %824 = vmatprep.subr.bf16.mxu0 0
      %825 = vmatpush1.bf16.msra.mxu0 0
      %826 = vmatprep.subr.bf16.mxu0 0
      %827 = vmatpush1.bf16.msra.mxu0 0
      %828 = vmatprep.subr.bf16.mxu0 0
      %829 = vmatpush1.bf16.msra.mxu0 0
      %830 = vmatprep.subr.bf16.mxu0 0
      %831 = vmatpush1.bf16.msra.mxu0 0
      %832 = vmatprep.subr.bf16.mxu0 0
      %833 = vmatpush1.bf16.msra.mxu0 0
      %834 = vmatprep.subr.bf16.mxu0 0
      %835 = vmatpush1.bf16.msra.mxu0 0
      %836 = vmatprep.subr.bf16.mxu0 0
      %837 = vmatpush1.bf16.msra.mxu0 0
      %838 = vmatprep.subr.bf16.mxu0 0
      %839 = vmatpush1.bf16.msra.mxu0 0
      %840 = vmatprep.mubr.bf16.mxu0 0
      %841 = vmatmul.mubr.bf16.gmra.mrb[0].mxu0 %v803
      %v842 = vpop.f32.mrb[0].mxu0
      %v843 = vadd.f32 0.0, %v842
      %v844 = vpop.f32.mrb[0].mxu0
      %v845 = vpop.f32.mrb[0].mxu0
      %v846 = vpop.f32.mrb[0].mxu0
      %847 = vdwg.mxu0
      %849 = vrot.lane.b32.xlu0 %v661, 112
      %v850 = vpop.permute.xlu0 %849
      %851 = vrot.lane.b32.xlu0 %v666, 80
      %v852 = vpop.permute.xlu0 %851
      %v854 = vsel %vm670, %v850, 0
      %v857 = vsel %vm670, %v852, 0
      %859 = vmatprep.subr.bf16.mxu0 0
      %860 = vmatpush1.bf16.xpose.msra.mxu0 %v857
      %861 = vmatprep.subr.bf16.mxu0 0
      %862 = vmatpush1.bf16.xpose.msra.mxu0 0
      %863 = vmatprep.subr.bf16.mxu0 0
      %864 = vmatpush1.bf16.xpose.msra.mxu0 0
      %865 = vmatprep.subr.bf16.mxu0 0
      %866 = vmatpush1.bf16.xpose.msra.mxu0 0
      %867 = vmatprep.subr.bf16.mxu0 0
      %868 = vmatpush1.bf16.xpose.msra.mxu0 0
      %869 = vmatprep.subr.bf16.mxu0 0
      %870 = vmatpush1.bf16.xpose.msra.mxu0 0
      %871 = vmatprep.subr.bf16.mxu0 0
      %872 = vmatpush1.bf16.xpose.msra.mxu0 0
      %873 = vmatprep.subr.bf16.mxu0 0
      %874 = vmatpush1.bf16.xpose.msra.mxu0 0
      %875 = vmatprep.subr.bf16.mxu0 0
      %876 = vmatpush1.bf16.xpose.msra.mxu0 0
      %877 = vmatprep.subr.bf16.mxu0 0
      %878 = vmatpush1.bf16.xpose.msra.mxu0 0
      %879 = vmatprep.subr.bf16.mxu0 0
      %880 = vmatpush1.bf16.xpose.msra.mxu0 0
      %881 = vmatprep.subr.bf16.mxu0 0
      %882 = vmatpush1.bf16.xpose.msra.mxu0 0
      %883 = vmatprep.subr.bf16.mxu0 0
      %884 = vmatpush1.bf16.xpose.msra.mxu0 0
      %885 = vmatprep.subr.bf16.mxu0 0
      %886 = vmatpush1.bf16.xpose.msra.mxu0 0
      %887 = vmatprep.subr.bf16.mxu0 0
      %888 = vmatpush1.bf16.xpose.msra.mxu0 0
      %889 = vmatprep.subr.bf16.mxu0 0
      %890 = vmatpush1.bf16.xpose.msra.mxu0 0
      %891 = vmatprep.mubr.bf16.mxu0 0
      %892 = vmatmul.mubr.bf16.gmra.mrb[0].mxu0 %v854
      %v893 = vpop.f32.mrb[0].mxu0
      %v894 = vadd.f32 0.0, %v893
      %v895 = vpop.f32.mrb[0].mxu0
      %v896 = vpop.f32.mrb[0].mxu0
      %v897 = vadd.f32 0.0, %v896
      %v898 = vpop.f32.mrb[0].mxu0
      %899 = vdwg.mxu0
      %901 = vrot.lane.b32.xlu0 %v897, 113
      %v902 = vpop.permute.xlu0 %901
      %v904 = vrot.slane %v897, 1
      %905 = vrot.lane.b32.xlu0 %v904, 122
      %v906 = vpop.permute.xlu0 %905
      %v908 = vsel %vm725, %v902, 0.0
      %v909 = vsel %vm727, %v908, %v906
      %910 = vrot.lane.b32.xlu0 %v897, 114
      %v911 = vpop.permute.xlu0 %910
      %913 = vrot.lane.b32.xlu0 %v904, 123
      %v914 = vpop.permute.xlu0 %913
      %v916 = vsel %vm727, %v911, 0.0
      %v917 = vsel %vm736, %v916, %v914
      %918 = vrot.lane.b32.xlu0 %v897, 115
      %v919 = vpop.permute.xlu0 %918
      %921 = vrot.lane.b32.xlu0 %v904, 124
      %v922 = vpop.permute.xlu0 %921
      %v924 = vsel %vm736, %v919, 0.0
      %v925 = vsel %vm745, %v924, %v922
      %926 = vrot.lane.b32.xlu0 %v897, 116
      %v927 = vpop.permute.xlu0 %926
      %929 = vrot.lane.b32.xlu0 %v904, 125
      %v930 = vpop.permute.xlu0 %929
      %v932 = vsel %vm745, %v927, 0.0
      %v933 = vsel %vm754, %v932, %v930
      %934 = vrot.lane.b32.xlu0 %v897, 117
      %v935 = vpop.permute.xlu0 %934
      %937 = vrot.lane.b32.xlu0 %v904, 126
      %v938 = vpop.permute.xlu0 %937
      %v940 = vsel %vm754, %v935, 0.0
      %v941 = vsel %vm763, %v940, %v938
      %942 = vrot.lane.b32.xlu0 %v897, 118
      %v943 = vpop.permute.xlu0 %942
      %945 = vrot.lane.b32.xlu0 %v904, 127
      %v946 = vpop.permute.xlu0 %945
      %v948 = vsel %vm763, %v943, 0.0
      %v949 = vsel %vm772, %v948, %v946
      %950 = vrot.lane.b32.xlu0 %v897, 119
      %v951 = vpop.permute.xlu0 %950
      %v953 = vsel %vm772, %v951, 0.0
      %954 = vrot.lane.b32.xlu0 %v897, 120
      %v955 = vpop.permute.xlu0 %954
      %v957 = vsel %vm781, %v909, %v917
      %v958 = vsel %vm783, %v957, %v925
      %v959 = vsel %vm785, %v958, %v933
      %v960 = vsel %vm658, %v959, %v941
      %v961 = vsel %vm788, %v960, %v949
      %v962 = vsel %vm790, %v961, %v953
      %v963 = vsel %vm792, %v962, %v955
      %v964 = vadd.f32 %v894, %v963
      %s965 = scalar_lea.vmem %s512, 8
      %966 = vst.msk [vmem:[%s965] sm:$0xff] %vm795, %v964
      %v967 = vpack.c.bf16 %v964, %v964
      %968 = vrot.lane.b32.xlu0 %v798, 48
      %v969 = vpop.permute.xlu0 %968
      %v971 = vsel %vm795, %v967, 0
      %v974 = vsel %vm658, %v969, 0
      %976 = vmatprep.subr.bf16.mxu0 0
      %977 = vmatpush1.bf16.msra.mxu0 %v974
      %978 = vmatprep.subr.bf16.mxu0 0
      %979 = vmatpush1.bf16.msra.mxu0 0
      %980 = vmatprep.subr.bf16.mxu0 0
      %981 = vmatpush1.bf16.msra.mxu0 0
      %982 = vmatprep.subr.bf16.mxu0 0
      %983 = vmatpush1.bf16.msra.mxu0 0
      %984 = vmatprep.subr.bf16.mxu0 0
      %985 = vmatpush1.bf16.msra.mxu0 0
      %986 = vmatprep.subr.bf16.mxu0 0
      %987 = vmatpush1.bf16.msra.mxu0 0
      %988 = vmatprep.subr.bf16.mxu0 0
      %989 = vmatpush1.bf16.msra.mxu0 0
      %990 = vmatprep.subr.bf16.mxu0 0
      %991 = vmatpush1.bf16.msra.mxu0 0
      %992 = vmatprep.subr.bf16.mxu0 0
      %993 = vmatpush1.bf16.msra.mxu0 0
      %994 = vmatprep.subr.bf16.mxu0 0
      %995 = vmatpush1.bf16.msra.mxu0 0
      %996 = vmatprep.subr.bf16.mxu0 0
      %997 = vmatpush1.bf16.msra.mxu0 0
      %998 = vmatprep.subr.bf16.mxu0 0
      %999 = vmatpush1.bf16.msra.mxu0 0
      %1000 = vmatprep.subr.bf16.mxu0 0
      %1001 = vmatpush1.bf16.msra.mxu0 0
      %1002 = vmatprep.subr.bf16.mxu0 0
      %1003 = vmatpush1.bf16.msra.mxu0 0
      %1004 = vmatprep.subr.bf16.mxu0 0
      %1005 = vmatpush1.bf16.msra.mxu0 0
      %1006 = vmatprep.subr.bf16.mxu0 0
      %1007 = vmatpush1.bf16.msra.mxu0 0
      %1008 = vmatprep.mubr.bf16.mxu0 0
      %1009 = vmatmul.mubr.bf16.gmra.mrb[0].mxu0 %v971
      %v1010 = vpop.f32.mrb[0].mxu0
      %v1011 = vadd.f32 0.0, %v1010
      %v1012 = vpop.f32.mrb[0].mxu0
      %v1013 = vpop.f32.mrb[0].mxu0
      %v1014 = vpop.f32.mrb[0].mxu0
      %1015 = vdwg.mxu0
      %1017 = vrot.lane.b32.xlu0 %v1011, 16
      %v1018 = vpop.permute.xlu0 %1017
      %v1020 = vsel %vm670, %v843, %v1018
      %v1021 = vpack.c.bf16 %v1020, %v1020
      %v1022 = vld [vmem:[%s6] sm:$0xf]
      %v1023 = vld [vmem:[%s6 + $0x4] sm:$0xf]
      %v1024 = vld [vmem:[%s6 + $0x8] sm:$0xf]
      %v1025 = vld [vmem:[%s6 + $0xc] sm:$0xf]
      %v1030 = vunpack.c.l.b16 %v1022
      %v1031 = vunpack.c.l.b16 %v1023
      %v1032 = vunpack.c.l.b16 %v1024
      %v1033 = vunpack.c.l.b16 %v1025
      %v1034 = vpack.c.b16 %v1031, %v1030
      %v1035 = vpack.c.b16 %v1033, %v1032
      %v1039 = vsel %vm532, %v1021, 0
      %1041 = vmatprep.subr.bf16.mxu0 0
      %1042 = vmatpush1.bf16.msra.mxu0 %v1034
      %1043 = vmatprep.subr.bf16.mxu0 0
      %1044 = vmatpush1.bf16.msra.mxu0 %v1035
      %1045 = vmatprep.subr.bf16.mxu0 0
      %1046 = vmatpush1.bf16.msra.mxu0 0
      %1047 = vmatprep.subr.bf16.mxu0 0
      %1048 = vmatpush1.bf16.msra.mxu0 0
      %1049 = vmatprep.subr.bf16.mxu0 0
      %1050 = vmatpush1.bf16.msra.mxu0 0
      %1051 = vmatprep.subr.bf16.mxu0 0
      %1052 = vmatpush1.bf16.msra.mxu0 0
      %1053 = vmatprep.subr.bf16.mxu0 0
      %1054 = vmatpush1.bf16.msra.mxu0 0
      %1055 = vmatprep.subr.bf16.mxu0 0
      %1056 = vmatpush1.bf16.msra.mxu0 0
      %1057 = vmatprep.subr.bf16.mxu0 0
      %1058 = vmatpush1.bf16.msra.mxu0 0
      %1059 = vmatprep.subr.bf16.mxu0 0
      %1060 = vmatpush1.bf16.msra.mxu0 0
      %1061 = vmatprep.subr.bf16.mxu0 0
      %1062 = vmatpush1.bf16.msra.mxu0 0
      %1063 = vmatprep.subr.bf16.mxu0 0
      %1064 = vmatpush1.bf16.msra.mxu0 0
      %1065 = vmatprep.subr.bf16.mxu0 0
      %1066 = vmatpush1.bf16.msra.mxu0 0
      %1067 = vmatprep.subr.bf16.mxu0 0
      %1068 = vmatpush1.bf16.msra.mxu0 0
      %1069 = vmatprep.subr.bf16.mxu0 0
      %1070 = vmatpush1.bf16.msra.mxu0 0
      %1071 = vmatprep.subr.bf16.mxu0 0
      %1072 = vmatpush1.bf16.msra.mxu0 0
      %1073 = vmatprep.mubr.bf16.mxu0 0
      %1074 = vmatmul.mubr.bf16.gmra.mrb[0].mxu0 %v1039
      %v1075 = vpop.f32.mrb[0].mxu0
      %v1076 = vadd.f32 0.0, %v1075
      %v1077 = vpop.f32.mrb[0].mxu0
      %v1078 = vpop.f32.mrb[0].mxu0
      %v1079 = vpop.f32.mrb[0].mxu0
      %1080 = vdwg.mxu0
      %v1081 = vadd.f32 %v514, %v1076
      %v1082 = vld [vmem:[%s7] sm:$0x1]
      %v1083 = vld [vmem:[%s8] sm:$0x1]
      %v1084 = vsel %vm532, %v1081, 0.0
      %1085 = vadd.xlane.f32.xlu0 %v1084
      %v1086 = vpop.xlane.xlu0 %1085
      %v1087 = vrcp.pop 32.0
      %v1088 = vmul.f32 %v1086, %v1087
      %v1089 = vsub.f32 %v1081, %v1088
      %v1090 = vmul.f32 %v1089, %v1089
      %v1091 = vsel %vm532, %v1090, 0.0
      %1092 = vadd.xlane.f32.xlu0 %v1091
      %v1093 = vpop.xlane.xlu0 %1092
      %v1094 = vmul.f32 %v1093, %v1087
      %v1095 = vadd.f32 %v1094, 1e-05
      %v1096 = vrsqrt.pop %v1095
      %v1097 = vmul.f32 %v1089, %v1096
      %v1099 = vlaneseq
      %v1100 = vshrl.u32 %v1099, 7
      %v1101 = vsub.s32 0, %v1100
      %v1102 = vrot.slane %v1082, %v1101
      %v1104 = vmul.f32 %v1097, %v1102
      %v1106 = vlaneseq
      %v1107 = vshrl.u32 %v1106, 7
      %v1108 = vsub.s32 0, %v1107
      %v1109 = vrot.slane %v1083, %v1108
      %v1111 = vadd.f32 %v1104, %v1109
      %v1112 = vpack.c.bf16 %v1111, %v1111
      %v1113 = vld [vmem:[%s9] sm:$0xf]
      %v1114 = vld [vmem:[%s9 + $0x4] sm:$0xf]
      %v1115 = vld [vmem:[%s9 + $0x8] sm:$0xf]
      %v1116 = vld [vmem:[%s9 + $0xc] sm:$0xf]
      %v1121 = vunpack.c.l.b16 %v1113
      %v1122 = vunpack.c.l.b16 %v1114
      %v1123 = vunpack.c.l.b16 %v1115
      %v1124 = vunpack.c.l.b16 %v1116
      %v1125 = vpack.c.b16 %v1122, %v1121
      %v1126 = vpack.c.b16 %v1124, %v1123
      %v1130 = vsel %vm532, %v1112, 0
      %1132 = vmatprep.subr.bf16.mxu0 0
      %1133 = vmatpush1.bf16.msra.mxu0 %v1125
      %1134 = vmatprep.subr.bf16.mxu0 0
      %1135 = vmatpush1.bf16.msra.mxu0 %v1126
      %1136 = vmatprep.subr.bf16.mxu0 0
      %1137 = vmatpush1.bf16.msra.mxu0 0
      %1138 = vmatprep.subr.bf16.mxu0 0
      %1139 = vmatpush1.bf16.msra.mxu0 0
      %1140 = vmatprep.subr.bf16.mxu0 0
      %1141 = vmatpush1.bf16.msra.mxu0 0
      %1142 = vmatprep.subr.bf16.mxu0 0
      %1143 = vmatpush1.bf16.msra.mxu0 0
      %1144 = vmatprep.subr.bf16.mxu0 0
      %1145 = vmatpush1.bf16.msra.mxu0 0
      %1146 = vmatprep.subr.bf16.mxu0 0
      %1147 = vmatpush1.bf16.msra.mxu0 0
      %1148 = vmatprep.subr.bf16.mxu0 0
      %1149 = vmatpush1.bf16.msra.mxu0 0
      %1150 = vmatprep.subr.bf16.mxu0 0
      %1151 = vmatpush1.bf16.msra.mxu0 0
      %1152 = vmatprep.subr.bf16.mxu0 0
      %1153 = vmatpush1.bf16.msra.mxu0 0
      %1154 = vmatprep.subr.bf16.mxu0 0
      %1155 = vmatpush1.bf16.msra.mxu0 0
      %1156 = vmatprep.subr.bf16.mxu0 0
      %1157 = vmatpush1.bf16.msra.mxu0 0
      %1158 = vmatprep.subr.bf16.mxu0 0
      %1159 = vmatpush1.bf16.msra.mxu0 0
      %1160 = vmatprep.subr.bf16.mxu0 0
      %1161 = vmatpush1.bf16.msra.mxu0 0
      %1162 = vmatprep.subr.bf16.mxu0 0
      %1163 = vmatpush1.bf16.msra.mxu0 0
      %1164 = vmatprep.mubr.bf16.mxu0 0
      %1165 = vmatmul.mubr.bf16.gmra.mrb[0].mxu0 %v1130
      %v1166 = vpop.f32.mrb[0].mxu0
      %v1167 = vadd.f32 0.0, %v1166
      %v1168 = vpop.f32.mrb[0].mxu0
      %v1169 = vpop.f32.mrb[0].mxu0
      %v1170 = vpop.f32.mrb[0].mxu0
      %1171 = vdwg.mxu0
      %v1172 = vmul.f32 %v1167, 1.702
      %v1173 = vxor.u32 %v1172, 2147483648
      %v1174 = vmul.f32 %v1173, 1.442695
      %v1175 = vpow.pop %v1174
      %v1176 = vadd.f32 %v1175, 1.0
      %v1177 = vrcp.pop %v1176
      %v1178 = vmul.f32 1.0, %v1177
      %v1179 = vmul.f32 %v1167, %v1178
      %vm1180 = vcmask 523264
      %1181 = vst.msk [vmem:[%s507] sm:$0xff] %vm1180, %v1179
      %v1182 = vpack.c.bf16 %v1179, %v1179
      %v1183 = vld [vmem:[%s10] sm:$0xf]
      %v1184 = vld [vmem:[%s10 + $0x4] sm:$0xf]
      %v1185 = vld [vmem:[%s10 + $0x8] sm:$0xf]
      %v1186 = vld [vmem:[%s10 + $0xc] sm:$0xf]
      %v1187 = vld [vmem:[%s10 + $0x10] sm:$0xf]
      %v1188 = vld [vmem:[%s10 + $0x14] sm:$0xf]
      %v1189 = vld [vmem:[%s10 + $0x18] sm:$0xf]
      %v1190 = vld [vmem:[%s10 + $0x1c] sm:$0xf]
      %v1199 = vunpack.c.l.b16 %v1183
      %v1200 = vunpack.c.l.b16 %v1184
      %v1201 = vunpack.c.l.b16 %v1185
      %v1202 = vunpack.c.l.b16 %v1186
      %v1203 = vunpack.c.l.b16 %v1187
      %v1204 = vunpack.c.l.b16 %v1188
      %v1205 = vunpack.c.l.b16 %v1189
      %v1206 = vunpack.c.l.b16 %v1190
      %v1207 = vpack.c.b16 %v1200, %v1199
      %v1208 = vpack.c.b16 %v1202, %v1201
      %v1209 = vpack.c.b16 %v1204, %v1203
      %v1210 = vpack.c.b16 %v1206, %v1205
      %v1216 = vsel %vm1180, %v1182, 0
      %1218 = vmatprep.subr.bf16.mxu0 0
      %1219 = vmatpush1.bf16.msra.mxu0 %v1207
      %1220 = vmatprep.subr.bf16.mxu0 0
      %1221 = vmatpush1.bf16.msra.mxu0 %v1208
      %1222 = vmatprep.subr.bf16.mxu0 0
      %1223 = vmatpush1.bf16.msra.mxu0 %v1209
      %1224 = vmatprep.subr.bf16.mxu0 0
      %1225 = vmatpush1.bf16.msra.mxu0 %v1210
      %1226 = vmatprep.subr.bf16.mxu0 0
      %1227 = vmatpush1.bf16.msra.mxu0 0
      %1228 = vmatprep.subr.bf16.mxu0 0
      %1229 = vmatpush1.bf16.msra.mxu0 0
      %1230 = vmatprep.subr.bf16.mxu0 0
      %1231 = vmatpush1.bf16.msra.mxu0 0
      %1232 = vmatprep.subr.bf16.mxu0 0
      %1233 = vmatpush1.bf16.msra.mxu0 0
      %1234 = vmatprep.subr.bf16.mxu0 0
      %1235 = vmatpush1.bf16.msra.mxu0 0
      %1236 = vmatprep.subr.bf16.mxu0 0
      %1237 = vmatpush1.bf16.msra.mxu0 0
      %1238 = vmatprep.subr.bf16.mxu0 0
      %1239 = vmatpush1.bf16.msra.mxu0 0
      %1240 = vmatprep.subr.bf16.mxu0 0
      %1241 = vmatpush1.bf16.msra.mxu0 0
      %1242 = vmatprep.subr.bf16.mxu0 0
      %1243 = vmatpush1.bf16.msra.mxu0 0
      %1244 = vmatprep.subr.bf16.mxu0 0
      %1245 = vmatpush1.bf16.msra.mxu0 0
      %1246 = vmatprep.subr.bf16.mxu0 0
      %1247 = vmatpush1.bf16.msra.mxu0 0
      %1248 = vmatprep.subr.bf16.mxu0 0
      %1249 = vmatpush1.bf16.msra.mxu0 0
      %1250 = vmatprep.mubr.bf16.mxu0 0
      %1251 = vmatmul.mubr.bf16.gmra.mrb[0].mxu0 %v1216
      %v1252 = vpop.f32.mrb[0].mxu0
      %v1253 = vadd.f32 0.0, %v1252
      %v1254 = vpop.f32.mrb[0].mxu0
      %v1255 = vpop.f32.mrb[0].mxu0
      %v1256 = vpop.f32.mrb[0].mxu0
      %1257 = vdwg.mxu0
      %v1258 = vadd.f32 %v1111, %v1253
      %v1259 = vld [vmem:[%s11] sm:$0x1]
      %v1260 = vld [vmem:[%s12] sm:$0x1]
      %v1261 = vsel %vm532, %v1258, 0.0
      %1262 = vadd.xlane.f32.xlu0 %v1261
      %v1263 = vpop.xlane.xlu0 %1262
      %v1264 = vmul.f32 %v1263, %v1087
      %v1265 = vsub.f32 %v1258, %v1264
      %v1266 = vmul.f32 %v1265, %v1265
      %v1267 = vsel %vm532, %v1266, 0.0
      %1268 = vadd.xlane.f32.xlu0 %v1267
      %v1269 = vpop.xlane.xlu0 %1268
      %v1270 = vmul.f32 %v1269, %v1087
      %v1271 = vadd.f32 %v1270, 1e-05
      %v1272 = vrsqrt.pop %v1271
      %v1273 = vmul.f32 %v1265, %v1272
      %v1275 = vlaneseq
      %v1276 = vshrl.u32 %v1275, 7
      %v1277 = vsub.s32 0, %v1276
      %v1278 = vrot.slane %v1259, %v1277
      %v1280 = vmul.f32 %v1273, %v1278
      %v1282 = vlaneseq
      %v1283 = vshrl.u32 %v1282, 7
      %v1284 = vsub.s32 0, %v1283
      %v1285 = vrot.slane %v1260, %v1284
      %v1287 = vadd.f32 %v1280, %v1285
      %1288 = vst.msk [vmem:[%s503] sm:$0xff] %vm532, %v1287
      %p1289 = scmp.lt.s32.totalorder %s27, 1
      %s1290 = scalar_select %p1289, %s27, 1
      %s1291 = smul.addr %s1290, 8
      %s1292 = scalar_lea.vmem %s13, %s1291
      %p1293 = scmp.lt.s32.totalorder %s27, 1
      %s1294 = scalar_select %p1293, %s27, 1
      %s1295 = smul.addr %s1294, 8
      %s1296 = scalar_lea.vmem %s14, %s1295
      %p1297 = scmp.lt.s32.totalorder %s27, 1
      %s1298 = scalar_select %p1297, %s27, 1
      %s1299 = smul.addr %s1298, 2
      %s1300 = smul.addr %s1299, 8
      %s1301 = scalar_lea.vmem %s15, %s1300
      // Predicated region
      $region73: #{decoder_layer_forward.1} parent=71 // pred_check
        %p1302 = pneg %p323
      $region74: #{decoder_layer_forward.1} parent=71 // pred_check_branch
        %1304 = sbr.rel (%p1302) target = $region76
      $region75: #{decoder_layer_forward.1} parent=71 // pred_region
        _
      $region76: #{decoder_layer_forward.1} parent=71 // pred_fallthru
        _
      // Predicated region
      $region77: #{decoder_layer_forward.1} parent=71 // pred_check
        %p1305 = pneg %p349
      $region78: #{decoder_layer_forward.1} parent=71 // pred_check_branch
        %1307 = sbr.rel (%p1305) target = $region80
      $region79: #{decoder_layer_forward.1} parent=71 // pred_region
        _
      $region80: #{decoder_layer_forward.1} parent=71 // pred_fallthru
        _
      // Predicated region
      $region81: #{decoder_layer_forward.1} parent=71 // pred_check
        %p1308 = pneg %p375
      $region82: #{decoder_layer_forward.1} parent=71 // pred_check_branch
        %1310 = sbr.rel (%p1308) target = $region84
      $region83: #{decoder_layer_forward.1} parent=71 // pred_region
        _
      $region84: #{decoder_layer_forward.1} parent=71 // pred_fallthru
        _
    $region72: #{decoder_layer_forward.1} parent=5 // pred_fallthru
      _
    %p1311 = scmp.le.s32.totalorder 2, %s22
    // Predicated region
    $region85: #{decoder_layer_forward.1} parent=5 // pred_check
      %p1312 = pneg %p1311
    $region86: #{decoder_layer_forward.1} parent=5 // pred_check_branch
      %1314 = sbr.rel (%p1312) target = $region88
    $region87: #{decoder_layer_forward.1} parent=5 // pred_region
      %s1315 = ssub.s32 %s22, 2
      // Predicated region
      $region89: #{decoder_layer_forward.1} parent=87 // pred_check
        %p1316 = pneg %p329
      $region90: #{decoder_layer_forward.1} parent=87 // pred_check_branch
        %1318 = sbr.rel (%p1316) target = $region92
      $region91: #{decoder_layer_forward.1} parent=87 // pred_region
        %p1319 = scmp.lt.s32.totalorder %s28, 1
        %s1320 = scalar_select %p1319, %s28, 1
        %s1321 = smul.addr %s1320, 8
        %s1322 = scalar_lea.vmem %s13, %s1321
      $region92: #{decoder_layer_forward.1} parent=87 // pred_fallthru
        _
      // Predicated region
      $region93: #{decoder_layer_forward.1} parent=87 // pred_check
        %p1323 = pneg %p355
      $region94: #{decoder_layer_forward.1} parent=87 // pred_check_branch
        %1325 = sbr.rel (%p1323) target = $region96
      $region95: #{decoder_layer_forward.1} parent=87 // pred_region
        %p1326 = scmp.lt.s32.totalorder %s28, 1
        %s1327 = scalar_select %p1326, %s28, 1
        %s1328 = smul.addr %s1327, 8
        %s1329 = scalar_lea.vmem %s14, %s1328
      $region96: #{decoder_layer_forward.1} parent=87 // pred_fallthru
        _
      // Predicated region
      $region97: #{decoder_layer_forward.1} parent=87 // pred_check
        %p1330 = pneg %p381
      $region98: #{decoder_layer_forward.1} parent=87 // pred_check_branch
        %1332 = sbr.rel (%p1330) target = $region100
      $region99: #{decoder_layer_forward.1} parent=87 // pred_region
        %p1333 = scmp.lt.s32.totalorder %s28, 1
        %s1334 = scalar_select %p1333, %s28, 1
        %s1335 = smul.addr %s1334, 2
        %s1336 = smul.addr %s1335, 8
        %s1337 = scalar_lea.vmem %s15, %s1336
      $region100: #{decoder_layer_forward.1} parent=87 // pred_fallthru
        _
    $region88: #{decoder_layer_forward.1} parent=5 // pred_fallthru
      _
  $region6: #{decoder_layer_forward.1} parent=0 // loop_footer
    %s26 = sadd.s32 1, %s22
  $region7: #{decoder_layer_forward.1} parent=0 // loop_footer_branch
    %21 = sbr.rel target = $region3
  $region8: #{decoder_layer_forward.1} parent=0 // loop_exit
    _

</llo_original>
